<compile_context>
chip_gen: v7x
topology: tpu7x:2x2x1
jax: 0.10.0
libtpu: 0.0.40
codegen_flags: <defaults>
</compile_context>

<pallas_src>
import math
import jax
import jax.numpy as jnp
from jax.experimental import pallas as pl
from jax.experimental.pallas import tpu as pltpu


def _lstm_activations(gates, c_prev, H):
    """gates: (B, 4H) pre-activations in PyTorch order i,f,g,o."""
    sg = jax.nn.sigmoid(gates)            # one full-width EUP pass covers i, f, o
    i = sg[:, 0 * H:1 * H]
    f = sg[:, 1 * H:2 * H]
    o = sg[:, 3 * H:4 * H]
    g = jnp.tanh(gates[:, 2 * H:3 * H])   # only the g slice needs tanh
    c = f * c_prev + i * g
    h = o * jnp.tanh(c)
    return h, c


def lstm_model_kernel(x_ref,                       # (TS, B, In) time-major chunk
                      wih1_ref, whh1_ref, b1_ref,  # layer-1 weights (full, resident)
                      wih2_ref, whh2_ref, b2_ref,  # layer-2 weights
                      wfc_ref, bfc_ref,            # fc weights
                      out_ref,                     # (B, C)
                      g_scr,                       # (TS, B, 4H) gate pre-activations
                      h1_scr,                      # (TS, B, H)  layer-1 chunk outputs
                      h1, c1, h2, c2):             # (B, H) carried cell state
    TS, B, In = x_ref.shape
    H = whh1_ref.shape[0]

    @pl.when(pl.program_id(0) == 0)
    def _init():
        h1[...] = jnp.zeros_like(h1)
        c1[...] = jnp.zeros_like(c1)
        h2[...] = jnp.zeros_like(h2)
        c2[...] = jnp.zeros_like(c2)

    # Hoist all weight loads out of the (unrolled) time loops.
    wih1 = wih1_ref[...]
    whh1 = whh1_ref[...]
    b1 = b1_ref[...]
    wih2 = wih2_ref[...]
    whh2 = whh2_ref[...]
    b2 = b2_ref[...]

    # ---- Layer 1: batched non-recurrent input projection (one MXU matmul),
    #      bias folded in, stored time-major so the loop can index g_scr[t]. ----
    x_flat = x_ref[...].reshape(TS * B, In)
    g_scr[...] = (
        jnp.dot(x_flat, wih1, preferred_element_type=jnp.float32) + b1
    ).reshape(TS, B, 4 * H)

    # ---- Layer 1 recurrence: only h @ Whh remains inside the serial loop. ----
    def step1(t, carry):
        h, c = carry
        gates = g_scr[t] + jnp.dot(h, whh1, preferred_element_type=jnp.float32)
        h, c = _lstm_activations(gates, c, H)
        h1_scr[t] = h
        return h, c

    h1_f, c1_f = jax.lax.fori_loop(0, TS, step1, (h1[...], c1[...]), unroll=True)
    h1[...] = h1_f
    c1[...] = c1_f

    # ---- Layer 2: batched input projection over the chunk of layer-1 outputs
    #      (reuses the gate scratch). ----
    g_scr[...] = (
        jnp.dot(h1_scr[...].reshape(TS * B, H), wih2,
                preferred_element_type=jnp.float32) + b2
    ).reshape(TS, B, 4 * H)

    # ---- Layer 2 recurrence. ----
    def step2(t, carry):
        h, c = carry
        gates = g_scr[t] + jnp.dot(h, whh2, preferred_element_type=jnp.float32)
        return _lstm_activations(gates, c, H)

    h2_f, c2_f = jax.lax.fori_loop(0, TS, step2, (h2[...], c2[...]), unroll=True)
    h2[...] = h2_f
    c2[...] = c2_f

    # ---- Final Linear on the last timestep's hidden state. ----
    @pl.when(pl.program_id(0) == pl.num_programs(0) - 1)
    def _finalize():
        out_ref[...] = (
            jnp.dot(h2[...], wfc_ref[...], preferred_element_type=jnp.float32)
            + bfc_ref[...]
        ).astype(out_ref.dtype)


def lstm_model_forward(x, params, *, chunk_timesteps=None):
    """x: (B, S, In) batch-first, like PyTorch. Returns (B, num_classes)."""
    B, S, In = x.shape
    wih1, whh1, b1, wih2, whh2, b2, wfc, bfc = params
    H = whh1.shape[0]
    C = wfc.shape[1]

    TS = S if chunk_timesteps is None else chunk_timesteps
    assert S % TS == 0, "sequence length must be divisible by the chunk size"
    n_chunks = S // TS

    Bp = ((B + 7) // 8) * 8  # sublane-align the batch (pad rows are discarded)

    # Time-major layout + batch pad. The wrapper transpose is acceptable here
    # because In < 128 (strided per-chunk DMA of the batch-first array would be
    # lane-sparse) and x is tiny.
    x_tm = jnp.transpose(x, (1, 0, 2))                       # (S, B, In)
    if Bp != B:
        x_tm = jnp.pad(x_tm, ((0, 0), (0, Bp - B), (0, 0)))  # (S, Bp, In)

    full = lambda a: pl.BlockSpec(a.shape, lambda k: (0,) * a.ndim)

    grid_spec = pltpu.PrefetchScalarGridSpec(
        num_scalar_prefetch=0,
        grid=(n_chunks,),
        in_specs=[
            pl.BlockSpec((TS, Bp, In), lambda k: (k, 0, 0)),  # x chunk
            full(wih1), full(whh1), full(b1),
            full(wih2), full(whh2), full(b2),
            full(wfc), full(bfc),
        ],
        out_specs=pl.BlockSpec((Bp, C), lambda k: (0, 0)),
        scratch_shapes=[
            pltpu.VMEM((TS, Bp, 4 * H), jnp.float32),  # gate pre-activations (reused)
            pltpu.VMEM((TS, Bp, H), jnp.float32),      # layer-1 chunk outputs
            pltpu.VMEM((Bp, H), jnp.float32),          # h1
            pltpu.VMEM((Bp, H), jnp.float32),          # c1
            pltpu.VMEM((Bp, H), jnp.float32),          # h2
            pltpu.VMEM((Bp, H), jnp.float32),          # c2
        ],
    )

    out = pl.pallas_call(
        lstm_model_kernel,
        out_shape=jax.ShapeDtypeStruct((Bp, C), jnp.float32),
        grid_spec=grid_spec,
        compiler_params=pltpu.CompilerParams(
            dimension_semantics=("arbitrary",)),  # sequential recurrence over chunks
    )(x_tm, wih1, whh1, b1, wih2, whh2, b2, wfc, bfc)

    return out[:B]


def init_params(key, input_size, hidden_size, num_classes):
    """Deterministic init mimicking PyTorch's U(-1/sqrt(H), 1/sqrt(H))."""
    H = hidden_size
    bound = 1.0 / math.sqrt(H)
    ks = jax.random.split(key, 12)
    u = lambda k, shape, b: jax.random.uniform(k, shape, jnp.float32, -b, b)

    # layer 1 (stored transposed: (in, 4H) / (H, 4H)); bias = b_ih + b_hh
    wih1 = u(ks[0], (input_size, 4 * H), bound)
    whh1 = u(ks[1], (H, 4 * H), bound)
    b1 = u(ks[2], (1, 4 * H), bound) + u(ks[3], (1, 4 * H), bound)
    # layer 2
    wih2 = u(ks[4], (H, 4 * H), bound)
    whh2 = u(ks[5], (H, 4 * H), bound)
    b2 = u(ks[6], (1, 4 * H), bound) + u(ks[7], (1, 4 * H), bound)
    # fc (Linear default init bound = 1/sqrt(fan_in) = 1/sqrt(H))
    wfc = u(ks[8], (H, num_classes), bound)
    bfc = u(ks[9], (1, num_classes), bound)
    return (wih1, whh1, b1, wih2, whh2, b2, wfc, bfc)


def reference_forward(x, params):
    """Pure-JAX reference replicating PyTorch nn.LSTM semantics."""
    wih1, whh1, b1, wih2, whh2, b2, wfc, bfc = params
    B, S, _ = x.shape
    H = whh1.shape[0]

    def cell(x_t, h, c, wih, whh, b):
        gates = x_t @ wih + h @ whh + b
        i = jax.nn.sigmoid(gates[:, 0 * H:1 * H])
        f = jax.nn.sigmoid(gates[:, 1 * H:2 * H])
        g = jnp.tanh(gates[:, 2 * H:3 * H])
        o = jax.nn.sigmoid(gates[:, 3 * H:4 * H])
        c = f * c + i * g
        h = o * jnp.tanh(c)
        return h, c

    h1 = c1 = h2 = c2 = jnp.zeros((B, H), jnp.float32)
    for t in range(S):
        h1, c1 = cell(x[:, t, :], h1, c1, wih1, whh1, b1)
        h2, c2 = cell(h1, h2, c2, wih2, whh2, b2)
    return h2 @ wfc + bfc


if __name__ == "__main__":
    batch, seq, input_size, hidden_size, num_classes = 2, 8, 16, 32, 4

    key = jax.random.PRNGKey(0)
    k_x, k_p = jax.random.split(key)
    x = jax.random.normal(k_x, (batch, seq, input_size), jnp.float32)
    params = init_params(k_p, input_size, hidden_size, num_classes)

    out = jax.block_until_ready(lstm_model_forward(x, params))
    ref = reference_forward(x, params)

    assert out.shape == (batch, num_classes)
    assert jnp.allclose(out, ref, atol=1e-5, rtol=1e-5), "mismatch vs reference"
    print("KERNEL_OK")
</pallas_src>

<mosaic_0001>
module attributes {stable_mosaic.version = 11 : i64} {
  func.func @lstm_model_kernel(%arg0: i32, %arg1: memref<8x8x16xf32, #tpu.memory_space<vmem>>, %arg2: memref<16x128xf32, #tpu.memory_space<vmem>>, %arg3: memref<32x128xf32, #tpu.memory_space<vmem>>, %arg4: memref<1x128xf32, #tpu.memory_space<vmem>>, %arg5: memref<32x128xf32, #tpu.memory_space<vmem>>, %arg6: memref<32x128xf32, #tpu.memory_space<vmem>>, %arg7: memref<1x128xf32, #tpu.memory_space<vmem>>, %arg8: memref<32x4xf32, #tpu.memory_space<vmem>>, %arg9: memref<1x4xf32, #tpu.memory_space<vmem>>, %arg10: memref<8x4xf32, #tpu.memory_space<vmem>>, %arg11: memref<8x8x128xf32, #tpu.memory_space<vmem>>, %arg12: memref<8x8x32xf32, #tpu.memory_space<vmem>>, %arg13: memref<8x32xf32, #tpu.memory_space<vmem>>, %arg14: memref<8x32xf32, #tpu.memory_space<vmem>>, %arg15: memref<8x32xf32, #tpu.memory_space<vmem>>, %arg16: memref<8x32xf32, #tpu.memory_space<vmem>>) attributes {dimension_semantics = [#tpu.dimension_semantics<arbitrary>], iteration_bounds = array<i64: 1>, scalar_prefetch = 0 : i64, scratch_operands = 6 : i64, tpu.core_type = #tpu.core_type<tc>, window_params = [{transform_indices = @transform_0, window_bounds = array<i64: 8, 8, 16>}, {pipeline_mode = #tpu.pipeline_mode<synchronous>, transform_indices = @transform_1, window_bounds = array<i64: 16, 128>}, {pipeline_mode = #tpu.pipeline_mode<synchronous>, transform_indices = @transform_2, window_bounds = array<i64: 32, 128>}, {pipeline_mode = #tpu.pipeline_mode<synchronous>, transform_indices = @transform_3, window_bounds = array<i64: 1, 128>}, {pipeline_mode = #tpu.pipeline_mode<synchronous>, transform_indices = @transform_4, window_bounds = array<i64: 32, 128>}, {pipeline_mode = #tpu.pipeline_mode<synchronous>, transform_indices = @transform_5, window_bounds = array<i64: 32, 128>}, {pipeline_mode = #tpu.pipeline_mode<synchronous>, transform_indices = @transform_6, window_bounds = array<i64: 1, 128>}, {pipeline_mode = #tpu.pipeline_mode<synchronous>, transform_indices = @transform_7, window_bounds = array<i64: 32, 4>}, {pipeline_mode = #tpu.pipeline_mode<synchronous>, transform_indices = @transform_8, window_bounds = array<i64: 1, 4>}, {pipeline_mode = #tpu.pipeline_mode<synchronous>, transform_indices = @transform_9, window_bounds = array<i64: 8, 4>}]} {
    %c0_i32 = arith.constant 0 : i32
    %0 = arith.cmpi eq, %arg0, %c0_i32 : i32
    %1 = arith.extui %0 : i1 to i32
    %c0_i32_0 = arith.constant 0 : i32
    %2 = arith.cmpi ne, %1, %c0_i32_0 : i32
    scf.if %2 {
      %cst_133 = arith.constant 0.000000e+00 : f32
      %386 = vector.broadcast %cst_133 : f32 to vector<8x32xf32>
      %c0_134 = arith.constant 0 : index
      %c0_135 = arith.constant 0 : index
      %387 = vector.load %arg13[%c0_134, %c0_135] : memref<8x32xf32, #tpu.memory_space<vmem>>, vector<8x32xf32>
      tpu.vector_store %arg13[%c0_134, %c0_135], %386 {strides = array<i32>} : memref<8x32xf32, #tpu.memory_space<vmem>>, vector<8x32xf32>,
      %cst_136 = arith.constant 0.000000e+00 : f32
      %388 = vector.broadcast %cst_136 : f32 to vector<8x32xf32>
      %c0_137 = arith.constant 0 : index
      %c0_138 = arith.constant 0 : index
      %389 = vector.load %arg14[%c0_137, %c0_138] : memref<8x32xf32, #tpu.memory_space<vmem>>, vector<8x32xf32>
      tpu.vector_store %arg14[%c0_137, %c0_138], %388 {strides = array<i32>} : memref<8x32xf32, #tpu.memory_space<vmem>>, vector<8x32xf32>,
      %cst_139 = arith.constant 0.000000e+00 : f32
      %390 = vector.broadcast %cst_139 : f32 to vector<8x32xf32>
      %c0_140 = arith.constant 0 : index
      %c0_141 = arith.constant 0 : index
      %391 = vector.load %arg15[%c0_140, %c0_141] : memref<8x32xf32, #tpu.memory_space<vmem>>, vector<8x32xf32>
      tpu.vector_store %arg15[%c0_140, %c0_141], %390 {strides = array<i32>} : memref<8x32xf32, #tpu.memory_space<vmem>>, vector<8x32xf32>,
      %cst_142 = arith.constant 0.000000e+00 : f32
      %392 = vector.broadcast %cst_142 : f32 to vector<8x32xf32>
      %c0_143 = arith.constant 0 : index
      %c0_144 = arith.constant 0 : index
      %393 = vector.load %arg16[%c0_143, %c0_144] : memref<8x32xf32, #tpu.memory_space<vmem>>, vector<8x32xf32>
      tpu.vector_store %arg16[%c0_143, %c0_144], %392 {strides = array<i32>} : memref<8x32xf32, #tpu.memory_space<vmem>>, vector<8x32xf32>,
    } else {
    }
    %c0 = arith.constant 0 : index
    %c0_1 = arith.constant 0 : index
    %3 = vector.load %arg2[%c0, %c0_1] : memref<16x128xf32, #tpu.memory_space<vmem>>, vector<16x128xf32>
    %c0_2 = arith.constant 0 : index
    %c0_3 = arith.constant 0 : index
    %4 = vector.load %arg3[%c0_2, %c0_3] : memref<32x128xf32, #tpu.memory_space<vmem>>, vector<32x128xf32>
    %c0_4 = arith.constant 0 : index
    %c0_5 = arith.constant 0 : index
    %5 = vector.load %arg4[%c0_4, %c0_5] : memref<1x128xf32, #tpu.memory_space<vmem>>, vector<1x128xf32>
    %c0_6 = arith.constant 0 : index
    %c0_7 = arith.constant 0 : index
    %6 = vector.load %arg5[%c0_6, %c0_7] : memref<32x128xf32, #tpu.memory_space<vmem>>, vector<32x128xf32>
    %c0_8 = arith.constant 0 : index
    %c0_9 = arith.constant 0 : index
    %7 = vector.load %arg6[%c0_8, %c0_9] : memref<32x128xf32, #tpu.memory_space<vmem>>, vector<32x128xf32>
    %c0_10 = arith.constant 0 : index
    %c0_11 = arith.constant 0 : index
    %8 = vector.load %arg7[%c0_10, %c0_11] : memref<1x128xf32, #tpu.memory_space<vmem>>, vector<1x128xf32>
    %c0_12 = arith.constant 0 : index
    %c0_13 = arith.constant 0 : index
    %c0_14 = arith.constant 0 : index
    %9 = vector.load %arg1[%c0_12, %c0_13, %c0_14] : memref<8x8x16xf32, #tpu.memory_space<vmem>>, vector<8x8x16xf32>
    %10 = vector.shape_cast %9 : vector<8x8x16xf32> to vector<64x16xf32>
    %cst = arith.constant dense<0.000000e+00> : vector<64x128xf32>
    %11 = tpu.matmul %10, %3, %cst {dimension_numbers = #tpu.dot_dimension_numbers<[1], [0], [0], [1], [0, 0, 1, 1], [], []>} : vector<64x16xf32>, vector<16x128xf32>, vector<64x128xf32> -> vector<64x128xf32>
    %12 = vector.broadcast %5 : vector<1x128xf32> to vector<64x128xf32>
    %13 = arith.addf %11, %12 : vector<64x128xf32>
    %14 = vector.shape_cast %13 : vector<64x128xf32> to vector<8x8x128xf32>
    %c0_15 = arith.constant 0 : index
    %c0_16 = arith.constant 0 : index
    %c0_17 = arith.constant 0 : index
    %15 = vector.load %arg11[%c0_15, %c0_16, %c0_17] : memref<8x8x128xf32, #tpu.memory_space<vmem>>, vector<8x8x128xf32>
    tpu.vector_store %arg11[%c0_15, %c0_16, %c0_17], %14 {strides = array<i32>} : memref<8x8x128xf32, #tpu.memory_space<vmem>>, vector<8x8x128xf32>,
    %c0_18 = arith.constant 0 : index
    %c0_19 = arith.constant 0 : index
    %16 = vector.load %arg13[%c0_18, %c0_19] : memref<8x32xf32, #tpu.memory_space<vmem>>, vector<8x32xf32>
    %c0_20 = arith.constant 0 : index
    %c0_21 = arith.constant 0 : index
    %17 = vector.load %arg14[%c0_20, %c0_21] : memref<8x32xf32, #tpu.memory_space<vmem>>, vector<8x32xf32>
    %c0_i32_22 = arith.constant 0 : i32
    %18 = arith.index_cast %c0_i32_22 : i32 to index
    %c0_23 = arith.constant 0 : index
    %c0_24 = arith.constant 0 : index
    %19 = vector.load %arg11[%18, %c0_23, %c0_24] : memref<8x8x128xf32, #tpu.memory_space<vmem>>, vector<1x8x128xf32>
    %20 = vector.shape_cast %19 : vector<1x8x128xf32> to vector<8x128xf32>
    %cst_25 = arith.constant dense<0.000000e+00> : vector<8x128xf32>
    %21 = tpu.matmul %16, %4, %cst_25 {dimension_numbers = #tpu.dot_dimension_numbers<[1], [0], [0], [1], [0, 0, 1, 1], [], []>} : vector<8x32xf32>, vector<32x128xf32>, vector<8x128xf32> -> vector<8x128xf32>
    %22 = arith.addf %20, %21 : vector<8x128xf32>
    %23 = arith.negf %22 : vector<8x128xf32>
    %24 = math.exp %23 : vector<8x128xf32>
    %cst_26 = arith.constant 1.000000e+00 : f32
    %25 = vector.broadcast %cst_26 : f32 to vector<8x128xf32>
    %26 = arith.addf %25, %24 : vector<8x128xf32>
    %27 = arith.divf %25, %26 : vector<8x128xf32>
    %28 = vector.extract_strided_slice %27 {offsets = [0, 0], sizes = [8, 32], strides = [1, 1]} : vector<8x128xf32> to vector<8x32xf32>
    %29 = vector.extract_strided_slice %27 {offsets = [0, 32], sizes = [8, 32], strides = [1, 1]} : vector<8x128xf32> to vector<8x32xf32>
    %30 = vector.extract_strided_slice %27 {offsets = [0, 96], sizes = [8, 32], strides = [1, 1]} : vector<8x128xf32> to vector<8x32xf32>
    %31 = vector.extract_strided_slice %22 {offsets = [0, 64], sizes = [8, 32], strides = [1, 1]} : vector<8x128xf32> to vector<8x32xf32>
    %32 = math.tanh %31 : vector<8x32xf32>
    %33 = arith.mulf %29, %17 : vector<8x32xf32>
    %34 = arith.mulf %28, %32 : vector<8x32xf32>
    %35 = arith.addf %33, %34 : vector<8x32xf32>
    %36 = math.tanh %35 : vector<8x32xf32>
    %37 = arith.mulf %30, %36 : vector<8x32xf32>
    %38 = arith.index_cast %c0_i32_22 : i32 to index
    %c0_27 = arith.constant 0 : index
    %c0_28 = arith.constant 0 : index
    %39 = vector.load %arg12[%38, %c0_27, %c0_28] : memref<8x8x32xf32, #tpu.memory_space<vmem>>, vector<1x8x32xf32>
    %40 = vector.shape_cast %39 : vector<1x8x32xf32> to vector<8x32xf32>
    %41 = vector.shape_cast %37 : vector<8x32xf32> to vector<1x8x32xf32>
    tpu.vector_store %arg12[%38, %c0_27, %c0_28], %41 {strides = array<i32>} : memref<8x8x32xf32, #tpu.memory_space<vmem>>, vector<1x8x32xf32>,
    %c1_i32 = arith.constant 1 : i32
    %42 = arith.index_cast %c1_i32 : i32 to index
    %c0_29 = arith.constant 0 : index
    %c0_30 = arith.constant 0 : index
    %43 = vector.load %arg11[%42, %c0_29, %c0_30] : memref<8x8x128xf32, #tpu.memory_space<vmem>>, vector<1x8x128xf32>
    %44 = vector.shape_cast %43 : vector<1x8x128xf32> to vector<8x128xf32>
    %cst_31 = arith.constant dense<0.000000e+00> : vector<8x128xf32>
    %45 = tpu.matmul %37, %4, %cst_31 {dimension_numbers = #tpu.dot_dimension_numbers<[1], [0], [0], [1], [0, 0, 1, 1], [], []>} : vector<8x32xf32>, vector<32x128xf32>, vector<8x128xf32> -> vector<8x128xf32>
    %46 = arith.addf %44, %45 : vector<8x128xf32>
    %47 = arith.negf %46 : vector<8x128xf32>
    %48 = math.exp %47 : vector<8x128xf32>
    %cst_32 = arith.constant 1.000000e+00 : f32
    %49 = vector.broadcast %cst_32 : f32 to vector<8x128xf32>
    %50 = arith.addf %49, %48 : vector<8x128xf32>
    %51 = arith.divf %49, %50 : vector<8x128xf32>
    %52 = vector.extract_strided_slice %51 {offsets = [0, 0], sizes = [8, 32], strides = [1, 1]} : vector<8x128xf32> to vector<8x32xf32>
    %53 = vector.extract_strided_slice %51 {offsets = [0, 32], sizes = [8, 32], strides = [1, 1]} : vector<8x128xf32> to vector<8x32xf32>
    %54 = vector.extract_strided_slice %51 {offsets = [0, 96], sizes = [8, 32], strides = [1, 1]} : vector<8x128xf32> to vector<8x32xf32>
    %55 = vector.extract_strided_slice %46 {offsets = [0, 64], sizes = [8, 32], strides = [1, 1]} : vector<8x128xf32> to vector<8x32xf32>
    %56 = math.tanh %55 : vector<8x32xf32>
    %57 = arith.mulf %53, %35 : vector<8x32xf32>
    %58 = arith.mulf %52, %56 : vector<8x32xf32>
    %59 = arith.addf %57, %58 : vector<8x32xf32>
    %60 = math.tanh %59 : vector<8x32xf32>
    %61 = arith.mulf %54, %60 : vector<8x32xf32>
    %62 = arith.index_cast %c1_i32 : i32 to index
    %c0_33 = arith.constant 0 : index
    %c0_34 = arith.constant 0 : index
    %63 = vector.load %arg12[%62, %c0_33, %c0_34] : memref<8x8x32xf32, #tpu.memory_space<vmem>>, vector<1x8x32xf32>
    %64 = vector.shape_cast %63 : vector<1x8x32xf32> to vector<8x32xf32>
    %65 = vector.shape_cast %61 : vector<8x32xf32> to vector<1x8x32xf32>
    tpu.vector_store %arg12[%62, %c0_33, %c0_34], %65 {strides = array<i32>} : memref<8x8x32xf32, #tpu.memory_space<vmem>>, vector<1x8x32xf32>,
    %c2_i32 = arith.constant 2 : i32
    %66 = arith.index_cast %c2_i32 : i32 to index
    %c0_35 = arith.constant 0 : index
    %c0_36 = arith.constant 0 : index
    %67 = vector.load %arg11[%66, %c0_35, %c0_36] : memref<8x8x128xf32, #tpu.memory_space<vmem>>, vector<1x8x128xf32>
    %68 = vector.shape_cast %67 : vector<1x8x128xf32> to vector<8x128xf32>
    %cst_37 = arith.constant dense<0.000000e+00> : vector<8x128xf32>
    %69 = tpu.matmul %61, %4, %cst_37 {dimension_numbers = #tpu.dot_dimension_numbers<[1], [0], [0], [1], [0, 0, 1, 1], [], []>} : vector<8x32xf32>, vector<32x128xf32>, vector<8x128xf32> -> vector<8x128xf32>
    %70 = arith.addf %68, %69 : vector<8x128xf32>
    %71 = arith.negf %70 : vector<8x128xf32>
    %72 = math.exp %71 : vector<8x128xf32>
    %cst_38 = arith.constant 1.000000e+00 : f32
    %73 = vector.broadcast %cst_38 : f32 to vector<8x128xf32>
    %74 = arith.addf %73, %72 : vector<8x128xf32>
    %75 = arith.divf %73, %74 : vector<8x128xf32>
    %76 = vector.extract_strided_slice %75 {offsets = [0, 0], sizes = [8, 32], strides = [1, 1]} : vector<8x128xf32> to vector<8x32xf32>
    %77 = vector.extract_strided_slice %75 {offsets = [0, 32], sizes = [8, 32], strides = [1, 1]} : vector<8x128xf32> to vector<8x32xf32>
    %78 = vector.extract_strided_slice %75 {offsets = [0, 96], sizes = [8, 32], strides = [1, 1]} : vector<8x128xf32> to vector<8x32xf32>
    %79 = vector.extract_strided_slice %70 {offsets = [0, 64], sizes = [8, 32], strides = [1, 1]} : vector<8x128xf32> to vector<8x32xf32>
    %80 = math.tanh %79 : vector<8x32xf32>
    %81 = arith.mulf %77, %59 : vector<8x32xf32>
    %82 = arith.mulf %76, %80 : vector<8x32xf32>
    %83 = arith.addf %81, %82 : vector<8x32xf32>
    %84 = math.tanh %83 : vector<8x32xf32>
    %85 = arith.mulf %78, %84 : vector<8x32xf32>
    %86 = arith.index_cast %c2_i32 : i32 to index
    %c0_39 = arith.constant 0 : index
    %c0_40 = arith.constant 0 : index
    %87 = vector.load %arg12[%86, %c0_39, %c0_40] : memref<8x8x32xf32, #tpu.memory_space<vmem>>, vector<1x8x32xf32>
    %88 = vector.shape_cast %87 : vector<1x8x32xf32> to vector<8x32xf32>
    %89 = vector.shape_cast %85 : vector<8x32xf32> to vector<1x8x32xf32>
    tpu.vector_store %arg12[%86, %c0_39, %c0_40], %89 {strides = array<i32>} : memref<8x8x32xf32, #tpu.memory_space<vmem>>, vector<1x8x32xf32>,
    %c3_i32 = arith.constant 3 : i32
    %90 = arith.index_cast %c3_i32 : i32 to index
    %c0_41 = arith.constant 0 : index
    %c0_42 = arith.constant 0 : index
    %91 = vector.load %arg11[%90, %c0_41, %c0_42] : memref<8x8x128xf32, #tpu.memory_space<vmem>>, vector<1x8x128xf32>
    %92 = vector.shape_cast %91 : vector<1x8x128xf32> to vector<8x128xf32>
    %cst_43 = arith.constant dense<0.000000e+00> : vector<8x128xf32>
    %93 = tpu.matmul %85, %4, %cst_43 {dimension_numbers = #tpu.dot_dimension_numbers<[1], [0], [0], [1], [0, 0, 1, 1], [], []>} : vector<8x32xf32>, vector<32x128xf32>, vector<8x128xf32> -> vector<8x128xf32>
    %94 = arith.addf %92, %93 : vector<8x128xf32>
    %95 = arith.negf %94 : vector<8x128xf32>
    %96 = math.exp %95 : vector<8x128xf32>
    %cst_44 = arith.constant 1.000000e+00 : f32
    %97 = vector.broadcast %cst_44 : f32 to vector<8x128xf32>
    %98 = arith.addf %97, %96 : vector<8x128xf32>
    %99 = arith.divf %97, %98 : vector<8x128xf32>
    %100 = vector.extract_strided_slice %99 {offsets = [0, 0], sizes = [8, 32], strides = [1, 1]} : vector<8x128xf32> to vector<8x32xf32>
    %101 = vector.extract_strided_slice %99 {offsets = [0, 32], sizes = [8, 32], strides = [1, 1]} : vector<8x128xf32> to vector<8x32xf32>
    %102 = vector.extract_strided_slice %99 {offsets = [0, 96], sizes = [8, 32], strides = [1, 1]} : vector<8x128xf32> to vector<8x32xf32>
    %103 = vector.extract_strided_slice %94 {offsets = [0, 64], sizes = [8, 32], strides = [1, 1]} : vector<8x128xf32> to vector<8x32xf32>
    %104 = math.tanh %103 : vector<8x32xf32>
    %105 = arith.mulf %101, %83 : vector<8x32xf32>
    %106 = arith.mulf %100, %104 : vector<8x32xf32>
    %107 = arith.addf %105, %106 : vector<8x32xf32>
    %108 = math.tanh %107 : vector<8x32xf32>
    %109 = arith.mulf %102, %108 : vector<8x32xf32>
    %110 = arith.index_cast %c3_i32 : i32 to index
    %c0_45 = arith.constant 0 : index
    %c0_46 = arith.constant 0 : index
    %111 = vector.load %arg12[%110, %c0_45, %c0_46] : memref<8x8x32xf32, #tpu.memory_space<vmem>>, vector<1x8x32xf32>
    %112 = vector.shape_cast %111 : vector<1x8x32xf32> to vector<8x32xf32>
    %113 = vector.shape_cast %109 : vector<8x32xf32> to vector<1x8x32xf32>
    tpu.vector_store %arg12[%110, %c0_45, %c0_46], %113 {strides = array<i32>} : memref<8x8x32xf32, #tpu.memory_space<vmem>>, vector<1x8x32xf32>,
    %c4_i32 = arith.constant 4 : i32
    %114 = arith.index_cast %c4_i32 : i32 to index
    %c0_47 = arith.constant 0 : index
    %c0_48 = arith.constant 0 : index
    %115 = vector.load %arg11[%114, %c0_47, %c0_48] : memref<8x8x128xf32, #tpu.memory_space<vmem>>, vector<1x8x128xf32>
    %116 = vector.shape_cast %115 : vector<1x8x128xf32> to vector<8x128xf32>
    %cst_49 = arith.constant dense<0.000000e+00> : vector<8x128xf32>
    %117 = tpu.matmul %109, %4, %cst_49 {dimension_numbers = #tpu.dot_dimension_numbers<[1], [0], [0], [1], [0, 0, 1, 1], [], []>} : vector<8x32xf32>, vector<32x128xf32>, vector<8x128xf32> -> vector<8x128xf32>
    %118 = arith.addf %116, %117 : vector<8x128xf32>
    %119 = arith.negf %118 : vector<8x128xf32>
    %120 = math.exp %119 : vector<8x128xf32>
    %cst_50 = arith.constant 1.000000e+00 : f32
    %121 = vector.broadcast %cst_50 : f32 to vector<8x128xf32>
    %122 = arith.addf %121, %120 : vector<8x128xf32>
    %123 = arith.divf %121, %122 : vector<8x128xf32>
    %124 = vector.extract_strided_slice %123 {offsets = [0, 0], sizes = [8, 32], strides = [1, 1]} : vector<8x128xf32> to vector<8x32xf32>
    %125 = vector.extract_strided_slice %123 {offsets = [0, 32], sizes = [8, 32], strides = [1, 1]} : vector<8x128xf32> to vector<8x32xf32>
    %126 = vector.extract_strided_slice %123 {offsets = [0, 96], sizes = [8, 32], strides = [1, 1]} : vector<8x128xf32> to vector<8x32xf32>
    %127 = vector.extract_strided_slice %118 {offsets = [0, 64], sizes = [8, 32], strides = [1, 1]} : vector<8x128xf32> to vector<8x32xf32>
    %128 = math.tanh %127 : vector<8x32xf32>
    %129 = arith.mulf %125, %107 : vector<8x32xf32>
    %130 = arith.mulf %124, %128 : vector<8x32xf32>
    %131 = arith.addf %129, %130 : vector<8x32xf32>
    %132 = math.tanh %131 : vector<8x32xf32>
    %133 = arith.mulf %126, %132 : vector<8x32xf32>
    %134 = arith.index_cast %c4_i32 : i32 to index
    %c0_51 = arith.constant 0 : index
    %c0_52 = arith.constant 0 : index
    %135 = vector.load %arg12[%134, %c0_51, %c0_52] : memref<8x8x32xf32, #tpu.memory_space<vmem>>, vector<1x8x32xf32>
    %136 = vector.shape_cast %135 : vector<1x8x32xf32> to vector<8x32xf32>
    %137 = vector.shape_cast %133 : vector<8x32xf32> to vector<1x8x32xf32>
    tpu.vector_store %arg12[%134, %c0_51, %c0_52], %137 {strides = array<i32>} : memref<8x8x32xf32, #tpu.memory_space<vmem>>, vector<1x8x32xf32>,
    %c5_i32 = arith.constant 5 : i32
    %138 = arith.index_cast %c5_i32 : i32 to index
    %c0_53 = arith.constant 0 : index
    %c0_54 = arith.constant 0 : index
    %139 = vector.load %arg11[%138, %c0_53, %c0_54] : memref<8x8x128xf32, #tpu.memory_space<vmem>>, vector<1x8x128xf32>
    %140 = vector.shape_cast %139 : vector<1x8x128xf32> to vector<8x128xf32>
    %cst_55 = arith.constant dense<0.000000e+00> : vector<8x128xf32>
    %141 = tpu.matmul %133, %4, %cst_55 {dimension_numbers = #tpu.dot_dimension_numbers<[1], [0], [0], [1], [0, 0, 1, 1], [], []>} : vector<8x32xf32>, vector<32x128xf32>, vector<8x128xf32> -> vector<8x128xf32>
    %142 = arith.addf %140, %141 : vector<8x128xf32>
    %143 = arith.negf %142 : vector<8x128xf32>
    %144 = math.exp %143 : vector<8x128xf32>
    %cst_56 = arith.constant 1.000000e+00 : f32
    %145 = vector.broadcast %cst_56 : f32 to vector<8x128xf32>
    %146 = arith.addf %145, %144 : vector<8x128xf32>
    %147 = arith.divf %145, %146 : vector<8x128xf32>
    %148 = vector.extract_strided_slice %147 {offsets = [0, 0], sizes = [8, 32], strides = [1, 1]} : vector<8x128xf32> to vector<8x32xf32>
    %149 = vector.extract_strided_slice %147 {offsets = [0, 32], sizes = [8, 32], strides = [1, 1]} : vector<8x128xf32> to vector<8x32xf32>
    %150 = vector.extract_strided_slice %147 {offsets = [0, 96], sizes = [8, 32], strides = [1, 1]} : vector<8x128xf32> to vector<8x32xf32>
    %151 = vector.extract_strided_slice %142 {offsets = [0, 64], sizes = [8, 32], strides = [1, 1]} : vector<8x128xf32> to vector<8x32xf32>
    %152 = math.tanh %151 : vector<8x32xf32>
    %153 = arith.mulf %149, %131 : vector<8x32xf32>
    %154 = arith.mulf %148, %152 : vector<8x32xf32>
    %155 = arith.addf %153, %154 : vector<8x32xf32>
    %156 = math.tanh %155 : vector<8x32xf32>
    %157 = arith.mulf %150, %156 : vector<8x32xf32>
    %158 = arith.index_cast %c5_i32 : i32 to index
    %c0_57 = arith.constant 0 : index
    %c0_58 = arith.constant 0 : index
    %159 = vector.load %arg12[%158, %c0_57, %c0_58] : memref<8x8x32xf32, #tpu.memory_space<vmem>>, vector<1x8x32xf32>
    %160 = vector.shape_cast %159 : vector<1x8x32xf32> to vector<8x32xf32>
    %161 = vector.shape_cast %157 : vector<8x32xf32> to vector<1x8x32xf32>
    tpu.vector_store %arg12[%158, %c0_57, %c0_58], %161 {strides = array<i32>} : memref<8x8x32xf32, #tpu.memory_space<vmem>>, vector<1x8x32xf32>,
    %c6_i32 = arith.constant 6 : i32
    %162 = arith.index_cast %c6_i32 : i32 to index
    %c0_59 = arith.constant 0 : index
    %c0_60 = arith.constant 0 : index
    %163 = vector.load %arg11[%162, %c0_59, %c0_60] : memref<8x8x128xf32, #tpu.memory_space<vmem>>, vector<1x8x128xf32>
    %164 = vector.shape_cast %163 : vector<1x8x128xf32> to vector<8x128xf32>
    %cst_61 = arith.constant dense<0.000000e+00> : vector<8x128xf32>
    %165 = tpu.matmul %157, %4, %cst_61 {dimension_numbers = #tpu.dot_dimension_numbers<[1], [0], [0], [1], [0, 0, 1, 1], [], []>} : vector<8x32xf32>, vector<32x128xf32>, vector<8x128xf32> -> vector<8x128xf32>
    %166 = arith.addf %164, %165 : vector<8x128xf32>
    %167 = arith.negf %166 : vector<8x128xf32>
    %168 = math.exp %167 : vector<8x128xf32>
    %cst_62 = arith.constant 1.000000e+00 : f32
    %169 = vector.broadcast %cst_62 : f32 to vector<8x128xf32>
    %170 = arith.addf %169, %168 : vector<8x128xf32>
    %171 = arith.divf %169, %170 : vector<8x128xf32>
    %172 = vector.extract_strided_slice %171 {offsets = [0, 0], sizes = [8, 32], strides = [1, 1]} : vector<8x128xf32> to vector<8x32xf32>
    %173 = vector.extract_strided_slice %171 {offsets = [0, 32], sizes = [8, 32], strides = [1, 1]} : vector<8x128xf32> to vector<8x32xf32>
    %174 = vector.extract_strided_slice %171 {offsets = [0, 96], sizes = [8, 32], strides = [1, 1]} : vector<8x128xf32> to vector<8x32xf32>
    %175 = vector.extract_strided_slice %166 {offsets = [0, 64], sizes = [8, 32], strides = [1, 1]} : vector<8x128xf32> to vector<8x32xf32>
    %176 = math.tanh %175 : vector<8x32xf32>
    %177 = arith.mulf %173, %155 : vector<8x32xf32>
    %178 = arith.mulf %172, %176 : vector<8x32xf32>
    %179 = arith.addf %177, %178 : vector<8x32xf32>
    %180 = math.tanh %179 : vector<8x32xf32>
    %181 = arith.mulf %174, %180 : vector<8x32xf32>
    %182 = arith.index_cast %c6_i32 : i32 to index
    %c0_63 = arith.constant 0 : index
    %c0_64 = arith.constant 0 : index
    %183 = vector.load %arg12[%182, %c0_63, %c0_64] : memref<8x8x32xf32, #tpu.memory_space<vmem>>, vector<1x8x32xf32>
    %184 = vector.shape_cast %183 : vector<1x8x32xf32> to vector<8x32xf32>
    %185 = vector.shape_cast %181 : vector<8x32xf32> to vector<1x8x32xf32>
    tpu.vector_store %arg12[%182, %c0_63, %c0_64], %185 {strides = array<i32>} : memref<8x8x32xf32, #tpu.memory_space<vmem>>, vector<1x8x32xf32>,
    %c7_i32 = arith.constant 7 : i32
    %186 = arith.index_cast %c7_i32 : i32 to index
    %c0_65 = arith.constant 0 : index
    %c0_66 = arith.constant 0 : index
    %187 = vector.load %arg11[%186, %c0_65, %c0_66] : memref<8x8x128xf32, #tpu.memory_space<vmem>>, vector<1x8x128xf32>
    %188 = vector.shape_cast %187 : vector<1x8x128xf32> to vector<8x128xf32>
    %cst_67 = arith.constant dense<0.000000e+00> : vector<8x128xf32>
    %189 = tpu.matmul %181, %4, %cst_67 {dimension_numbers = #tpu.dot_dimension_numbers<[1], [0], [0], [1], [0, 0, 1, 1], [], []>} : vector<8x32xf32>, vector<32x128xf32>, vector<8x128xf32> -> vector<8x128xf32>
    %190 = arith.addf %188, %189 : vector<8x128xf32>
    %191 = arith.negf %190 : vector<8x128xf32>
    %192 = math.exp %191 : vector<8x128xf32>
    %cst_68 = arith.constant 1.000000e+00 : f32
    %193 = vector.broadcast %cst_68 : f32 to vector<8x128xf32>
    %194 = arith.addf %193, %192 : vector<8x128xf32>
    %195 = arith.divf %193, %194 : vector<8x128xf32>
    %196 = vector.extract_strided_slice %195 {offsets = [0, 0], sizes = [8, 32], strides = [1, 1]} : vector<8x128xf32> to vector<8x32xf32>
    %197 = vector.extract_strided_slice %195 {offsets = [0, 32], sizes = [8, 32], strides = [1, 1]} : vector<8x128xf32> to vector<8x32xf32>
    %198 = vector.extract_strided_slice %195 {offsets = [0, 96], sizes = [8, 32], strides = [1, 1]} : vector<8x128xf32> to vector<8x32xf32>
    %199 = vector.extract_strided_slice %190 {offsets = [0, 64], sizes = [8, 32], strides = [1, 1]} : vector<8x128xf32> to vector<8x32xf32>
    %200 = math.tanh %199 : vector<8x32xf32>
    %201 = arith.mulf %197, %179 : vector<8x32xf32>
    %202 = arith.mulf %196, %200 : vector<8x32xf32>
    %203 = arith.addf %201, %202 : vector<8x32xf32>
    %204 = math.tanh %203 : vector<8x32xf32>
    %205 = arith.mulf %198, %204 : vector<8x32xf32>
    %206 = arith.index_cast %c7_i32 : i32 to index
    %c0_69 = arith.constant 0 : index
    %c0_70 = arith.constant 0 : index
    %207 = vector.load %arg12[%206, %c0_69, %c0_70] : memref<8x8x32xf32, #tpu.memory_space<vmem>>, vector<1x8x32xf32>
    %208 = vector.shape_cast %207 : vector<1x8x32xf32> to vector<8x32xf32>
    %209 = vector.shape_cast %205 : vector<8x32xf32> to vector<1x8x32xf32>
    tpu.vector_store %arg12[%206, %c0_69, %c0_70], %209 {strides = array<i32>} : memref<8x8x32xf32, #tpu.memory_space<vmem>>, vector<1x8x32xf32>,
    %c8_i32 = arith.constant 8 : i32
    %c0_71 = arith.constant 0 : index
    %c0_72 = arith.constant 0 : index
    %210 = vector.load %arg13[%c0_71, %c0_72] : memref<8x32xf32, #tpu.memory_space<vmem>>, vector<8x32xf32>
    tpu.vector_store %arg13[%c0_71, %c0_72], %205 {strides = array<i32>} : memref<8x32xf32, #tpu.memory_space<vmem>>, vector<8x32xf32>,
    %c0_73 = arith.constant 0 : index
    %c0_74 = arith.constant 0 : index
    %211 = vector.load %arg14[%c0_73, %c0_74] : memref<8x32xf32, #tpu.memory_space<vmem>>, vector<8x32xf32>
    tpu.vector_store %arg14[%c0_73, %c0_74], %203 {strides = array<i32>} : memref<8x32xf32, #tpu.memory_space<vmem>>, vector<8x32xf32>,
    %c0_75 = arith.constant 0 : index
    %c0_76 = arith.constant 0 : index
    %c0_77 = arith.constant 0 : index
    %212 = vector.load %arg12[%c0_75, %c0_76, %c0_77] : memref<8x8x32xf32, #tpu.memory_space<vmem>>, vector<8x8x32xf32>
    %213 = vector.shape_cast %212 : vector<8x8x32xf32> to vector<64x32xf32>
    %cst_78 = arith.constant dense<0.000000e+00> : vector<64x128xf32>
    %214 = tpu.matmul %213, %6, %cst_78 {dimension_numbers = #tpu.dot_dimension_numbers<[1], [0], [0], [1], [0, 0, 1, 1], [], []>} : vector<64x32xf32>, vector<32x128xf32>, vector<64x128xf32> -> vector<64x128xf32>
    %215 = vector.broadcast %8 : vector<1x128xf32> to vector<64x128xf32>
    %216 = arith.addf %214, %215 : vector<64x128xf32>
    %217 = vector.shape_cast %216 : vector<64x128xf32> to vector<8x8x128xf32>
    %c0_79 = arith.constant 0 : index
    %c0_80 = arith.constant 0 : index
    %c0_81 = arith.constant 0 : index
    %218 = vector.load %arg11[%c0_79, %c0_80, %c0_81] : memref<8x8x128xf32, #tpu.memory_space<vmem>>, vector<8x8x128xf32>
    tpu.vector_store %arg11[%c0_79, %c0_80, %c0_81], %217 {strides = array<i32>} : memref<8x8x128xf32, #tpu.memory_space<vmem>>, vector<8x8x128xf32>,
    %c0_82 = arith.constant 0 : index
    %c0_83 = arith.constant 0 : index
    %219 = vector.load %arg15[%c0_82, %c0_83] : memref<8x32xf32, #tpu.memory_space<vmem>>, vector<8x32xf32>
    %c0_84 = arith.constant 0 : index
    %c0_85 = arith.constant 0 : index
    %220 = vector.load %arg16[%c0_84, %c0_85] : memref<8x32xf32, #tpu.memory_space<vmem>>, vector<8x32xf32>
    %c0_i32_86 = arith.constant 0 : i32
    %221 = arith.index_cast %c0_i32_86 : i32 to index
    %c0_87 = arith.constant 0 : index
    %c0_88 = arith.constant 0 : index
    %222 = vector.load %arg11[%221, %c0_87, %c0_88] : memref<8x8x128xf32, #tpu.memory_space<vmem>>, vector<1x8x128xf32>
    %223 = vector.shape_cast %222 : vector<1x8x128xf32> to vector<8x128xf32>
    %cst_89 = arith.constant dense<0.000000e+00> : vector<8x128xf32>
    %224 = tpu.matmul %219, %7, %cst_89 {dimension_numbers = #tpu.dot_dimension_numbers<[1], [0], [0], [1], [0, 0, 1, 1], [], []>} : vector<8x32xf32>, vector<32x128xf32>, vector<8x128xf32> -> vector<8x128xf32>
    %225 = arith.addf %223, %224 : vector<8x128xf32>
    %226 = arith.negf %225 : vector<8x128xf32>
    %227 = math.exp %226 : vector<8x128xf32>
    %cst_90 = arith.constant 1.000000e+00 : f32
    %228 = vector.broadcast %cst_90 : f32 to vector<8x128xf32>
    %229 = arith.addf %228, %227 : vector<8x128xf32>
    %230 = arith.divf %228, %229 : vector<8x128xf32>
    %231 = vector.extract_strided_slice %230 {offsets = [0, 0], sizes = [8, 32], strides = [1, 1]} : vector<8x128xf32> to vector<8x32xf32>
    %232 = vector.extract_strided_slice %230 {offsets = [0, 32], sizes = [8, 32], strides = [1, 1]} : vector<8x128xf32> to vector<8x32xf32>
    %233 = vector.extract_strided_slice %230 {offsets = [0, 96], sizes = [8, 32], strides = [1, 1]} : vector<8x128xf32> to vector<8x32xf32>
    %234 = vector.extract_strided_slice %225 {offsets = [0, 64], sizes = [8, 32], strides = [1, 1]} : vector<8x128xf32> to vector<8x32xf32>
    %235 = math.tanh %234 : vector<8x32xf32>
    %236 = arith.mulf %232, %220 : vector<8x32xf32>
    %237 = arith.mulf %231, %235 : vector<8x32xf32>
    %238 = arith.addf %236, %237 : vector<8x32xf32>
    %239 = math.tanh %238 : vector<8x32xf32>
    %240 = arith.mulf %233, %239 : vector<8x32xf32>
    %c1_i32_91 = arith.constant 1 : i32
    %241 = arith.index_cast %c1_i32_91 : i32 to index
    %c0_92 = arith.constant 0 : index
    %c0_93 = arith.constant 0 : index
    %242 = vector.load %arg11[%241, %c0_92, %c0_93] : memref<8x8x128xf32, #tpu.memory_space<vmem>>, vector<1x8x128xf32>
    %243 = vector.shape_cast %242 : vector<1x8x128xf32> to vector<8x128xf32>
    %cst_94 = arith.constant dense<0.000000e+00> : vector<8x128xf32>
    %244 = tpu.matmul %240, %7, %cst_94 {dimension_numbers = #tpu.dot_dimension_numbers<[1], [0], [0], [1], [0, 0, 1, 1], [], []>} : vector<8x32xf32>, vector<32x128xf32>, vector<8x128xf32> -> vector<8x128xf32>
    %245 = arith.addf %243, %244 : vector<8x128xf32>
    %246 = arith.negf %245 : vector<8x128xf32>
    %247 = math.exp %246 : vector<8x128xf32>
    %cst_95 = arith.constant 1.000000e+00 : f32
    %248 = vector.broadcast %cst_95 : f32 to vector<8x128xf32>
    %249 = arith.addf %248, %247 : vector<8x128xf32>
    %250 = arith.divf %248, %249 : vector<8x128xf32>
    %251 = vector.extract_strided_slice %250 {offsets = [0, 0], sizes = [8, 32], strides = [1, 1]} : vector<8x128xf32> to vector<8x32xf32>
    %252 = vector.extract_strided_slice %250 {offsets = [0, 32], sizes = [8, 32], strides = [1, 1]} : vector<8x128xf32> to vector<8x32xf32>
    %253 = vector.extract_strided_slice %250 {offsets = [0, 96], sizes = [8, 32], strides = [1, 1]} : vector<8x128xf32> to vector<8x32xf32>
    %254 = vector.extract_strided_slice %245 {offsets = [0, 64], sizes = [8, 32], strides = [1, 1]} : vector<8x128xf32> to vector<8x32xf32>
    %255 = math.tanh %254 : vector<8x32xf32>
    %256 = arith.mulf %252, %238 : vector<8x32xf32>
    %257 = arith.mulf %251, %255 : vector<8x32xf32>
    %258 = arith.addf %256, %257 : vector<8x32xf32>
    %259 = math.tanh %258 : vector<8x32xf32>
    %260 = arith.mulf %253, %259 : vector<8x32xf32>
    %c2_i32_96 = arith.constant 2 : i32
    %261 = arith.index_cast %c2_i32_96 : i32 to index
    %c0_97 = arith.constant 0 : index
    %c0_98 = arith.constant 0 : index
    %262 = vector.load %arg11[%261, %c0_97, %c0_98] : memref<8x8x128xf32, #tpu.memory_space<vmem>>, vector<1x8x128xf32>
    %263 = vector.shape_cast %262 : vector<1x8x128xf32> to vector<8x128xf32>
    %cst_99 = arith.constant dense<0.000000e+00> : vector<8x128xf32>
    %264 = tpu.matmul %260, %7, %cst_99 {dimension_numbers = #tpu.dot_dimension_numbers<[1], [0], [0], [1], [0, 0, 1, 1], [], []>} : vector<8x32xf32>, vector<32x128xf32>, vector<8x128xf32> -> vector<8x128xf32>
    %265 = arith.addf %263, %264 : vector<8x128xf32>
    %266 = arith.negf %265 : vector<8x128xf32>
    %267 = math.exp %266 : vector<8x128xf32>
    %cst_100 = arith.constant 1.000000e+00 : f32
    %268 = vector.broadcast %cst_100 : f32 to vector<8x128xf32>
    %269 = arith.addf %268, %267 : vector<8x128xf32>
    %270 = arith.divf %268, %269 : vector<8x128xf32>
    %271 = vector.extract_strided_slice %270 {offsets = [0, 0], sizes = [8, 32], strides = [1, 1]} : vector<8x128xf32> to vector<8x32xf32>
    %272 = vector.extract_strided_slice %270 {offsets = [0, 32], sizes = [8, 32], strides = [1, 1]} : vector<8x128xf32> to vector<8x32xf32>
    %273 = vector.extract_strided_slice %270 {offsets = [0, 96], sizes = [8, 32], strides = [1, 1]} : vector<8x128xf32> to vector<8x32xf32>
    %274 = vector.extract_strided_slice %265 {offsets = [0, 64], sizes = [8, 32], strides = [1, 1]} : vector<8x128xf32> to vector<8x32xf32>
    %275 = math.tanh %274 : vector<8x32xf32>
    %276 = arith.mulf %272, %258 : vector<8x32xf32>
    %277 = arith.mulf %271, %275 : vector<8x32xf32>
    %278 = arith.addf %276, %277 : vector<8x32xf32>
    %279 = math.tanh %278 : vector<8x32xf32>
    %280 = arith.mulf %273, %279 : vector<8x32xf32>
    %c3_i32_101 = arith.constant 3 : i32
    %281 = arith.index_cast %c3_i32_101 : i32 to index
    %c0_102 = arith.constant 0 : index
    %c0_103 = arith.constant 0 : index
    %282 = vector.load %arg11[%281, %c0_102, %c0_103] : memref<8x8x128xf32, #tpu.memory_space<vmem>>, vector<1x8x128xf32>
    %283 = vector.shape_cast %282 : vector<1x8x128xf32> to vector<8x128xf32>
    %cst_104 = arith.constant dense<0.000000e+00> : vector<8x128xf32>
    %284 = tpu.matmul %280, %7, %cst_104 {dimension_numbers = #tpu.dot_dimension_numbers<[1], [0], [0], [1], [0, 0, 1, 1], [], []>} : vector<8x32xf32>, vector<32x128xf32>, vector<8x128xf32> -> vector<8x128xf32>
    %285 = arith.addf %283, %284 : vector<8x128xf32>
    %286 = arith.negf %285 : vector<8x128xf32>
    %287 = math.exp %286 : vector<8x128xf32>
    %cst_105 = arith.constant 1.000000e+00 : f32
    %288 = vector.broadcast %cst_105 : f32 to vector<8x128xf32>
    %289 = arith.addf %288, %287 : vector<8x128xf32>
    %290 = arith.divf %288, %289 : vector<8x128xf32>
    %291 = vector.extract_strided_slice %290 {offsets = [0, 0], sizes = [8, 32], strides = [1, 1]} : vector<8x128xf32> to vector<8x32xf32>
    %292 = vector.extract_strided_slice %290 {offsets = [0, 32], sizes = [8, 32], strides = [1, 1]} : vector<8x128xf32> to vector<8x32xf32>
    %293 = vector.extract_strided_slice %290 {offsets = [0, 96], sizes = [8, 32], strides = [1, 1]} : vector<8x128xf32> to vector<8x32xf32>
    %294 = vector.extract_strided_slice %285 {offsets = [0, 64], sizes = [8, 32], strides = [1, 1]} : vector<8x128xf32> to vector<8x32xf32>
    %295 = math.tanh %294 : vector<8x32xf32>
    %296 = arith.mulf %292, %278 : vector<8x32xf32>
    %297 = arith.mulf %291, %295 : vector<8x32xf32>
    %298 = arith.addf %296, %297 : vector<8x32xf32>
    %299 = math.tanh %298 : vector<8x32xf32>
    %300 = arith.mulf %293, %299 : vector<8x32xf32>
    %c4_i32_106 = arith.constant 4 : i32
    %301 = arith.index_cast %c4_i32_106 : i32 to index
    %c0_107 = arith.constant 0 : index
    %c0_108 = arith.constant 0 : index
    %302 = vector.load %arg11[%301, %c0_107, %c0_108] : memref<8x8x128xf32, #tpu.memory_space<vmem>>, vector<1x8x128xf32>
    %303 = vector.shape_cast %302 : vector<1x8x128xf32> to vector<8x128xf32>
    %cst_109 = arith.constant dense<0.000000e+00> : vector<8x128xf32>
    %304 = tpu.matmul %300, %7, %cst_109 {dimension_numbers = #tpu.dot_dimension_numbers<[1], [0], [0], [1], [0, 0, 1, 1], [], []>} : vector<8x32xf32>, vector<32x128xf32>, vector<8x128xf32> -> vector<8x128xf32>
    %305 = arith.addf %303, %304 : vector<8x128xf32>
    %306 = arith.negf %305 : vector<8x128xf32>
    %307 = math.exp %306 : vector<8x128xf32>
    %cst_110 = arith.constant 1.000000e+00 : f32
    %308 = vector.broadcast %cst_110 : f32 to vector<8x128xf32>
    %309 = arith.addf %308, %307 : vector<8x128xf32>
    %310 = arith.divf %308, %309 : vector<8x128xf32>
    %311 = vector.extract_strided_slice %310 {offsets = [0, 0], sizes = [8, 32], strides = [1, 1]} : vector<8x128xf32> to vector<8x32xf32>
    %312 = vector.extract_strided_slice %310 {offsets = [0, 32], sizes = [8, 32], strides = [1, 1]} : vector<8x128xf32> to vector<8x32xf32>
    %313 = vector.extract_strided_slice %310 {offsets = [0, 96], sizes = [8, 32], strides = [1, 1]} : vector<8x128xf32> to vector<8x32xf32>
    %314 = vector.extract_strided_slice %305 {offsets = [0, 64], sizes = [8, 32], strides = [1, 1]} : vector<8x128xf32> to vector<8x32xf32>
    %315 = math.tanh %314 : vector<8x32xf32>
    %316 = arith.mulf %312, %298 : vector<8x32xf32>
    %317 = arith.mulf %311, %315 : vector<8x32xf32>
    %318 = arith.addf %316, %317 : vector<8x32xf32>
    %319 = math.tanh %318 : vector<8x32xf32>
    %320 = arith.mulf %313, %319 : vector<8x32xf32>
    %c5_i32_111 = arith.constant 5 : i32
    %321 = arith.index_cast %c5_i32_111 : i32 to index
    %c0_112 = arith.constant 0 : index
    %c0_113 = arith.constant 0 : index
    %322 = vector.load %arg11[%321, %c0_112, %c0_113] : memref<8x8x128xf32, #tpu.memory_space<vmem>>, vector<1x8x128xf32>
    %323 = vector.shape_cast %322 : vector<1x8x128xf32> to vector<8x128xf32>
    %cst_114 = arith.constant dense<0.000000e+00> : vector<8x128xf32>
    %324 = tpu.matmul %320, %7, %cst_114 {dimension_numbers = #tpu.dot_dimension_numbers<[1], [0], [0], [1], [0, 0, 1, 1], [], []>} : vector<8x32xf32>, vector<32x128xf32>, vector<8x128xf32> -> vector<8x128xf32>
    %325 = arith.addf %323, %324 : vector<8x128xf32>
    %326 = arith.negf %325 : vector<8x128xf32>
    %327 = math.exp %326 : vector<8x128xf32>
    %cst_115 = arith.constant 1.000000e+00 : f32
    %328 = vector.broadcast %cst_115 : f32 to vector<8x128xf32>
    %329 = arith.addf %328, %327 : vector<8x128xf32>
    %330 = arith.divf %328, %329 : vector<8x128xf32>
    %331 = vector.extract_strided_slice %330 {offsets = [0, 0], sizes = [8, 32], strides = [1, 1]} : vector<8x128xf32> to vector<8x32xf32>
    %332 = vector.extract_strided_slice %330 {offsets = [0, 32], sizes = [8, 32], strides = [1, 1]} : vector<8x128xf32> to vector<8x32xf32>
    %333 = vector.extract_strided_slice %330 {offsets = [0, 96], sizes = [8, 32], strides = [1, 1]} : vector<8x128xf32> to vector<8x32xf32>
    %334 = vector.extract_strided_slice %325 {offsets = [0, 64], sizes = [8, 32], strides = [1, 1]} : vector<8x128xf32> to vector<8x32xf32>
    %335 = math.tanh %334 : vector<8x32xf32>
    %336 = arith.mulf %332, %318 : vector<8x32xf32>
    %337 = arith.mulf %331, %335 : vector<8x32xf32>
    %338 = arith.addf %336, %337 : vector<8x32xf32>
    %339 = math.tanh %338 : vector<8x32xf32>
    %340 = arith.mulf %333, %339 : vector<8x32xf32>
    %c6_i32_116 = arith.constant 6 : i32
    %341 = arith.index_cast %c6_i32_116 : i32 to index
    %c0_117 = arith.constant 0 : index
    %c0_118 = arith.constant 0 : index
    %342 = vector.load %arg11[%341, %c0_117, %c0_118] : memref<8x8x128xf32, #tpu.memory_space<vmem>>, vector<1x8x128xf32>
    %343 = vector.shape_cast %342 : vector<1x8x128xf32> to vector<8x128xf32>
    %cst_119 = arith.constant dense<0.000000e+00> : vector<8x128xf32>
    %344 = tpu.matmul %340, %7, %cst_119 {dimension_numbers = #tpu.dot_dimension_numbers<[1], [0], [0], [1], [0, 0, 1, 1], [], []>} : vector<8x32xf32>, vector<32x128xf32>, vector<8x128xf32> -> vector<8x128xf32>
    %345 = arith.addf %343, %344 : vector<8x128xf32>
    %346 = arith.negf %345 : vector<8x128xf32>
    %347 = math.exp %346 : vector<8x128xf32>
    %cst_120 = arith.constant 1.000000e+00 : f32
    %348 = vector.broadcast %cst_120 : f32 to vector<8x128xf32>
    %349 = arith.addf %348, %347 : vector<8x128xf32>
    %350 = arith.divf %348, %349 : vector<8x128xf32>
    %351 = vector.extract_strided_slice %350 {offsets = [0, 0], sizes = [8, 32], strides = [1, 1]} : vector<8x128xf32> to vector<8x32xf32>
    %352 = vector.extract_strided_slice %350 {offsets = [0, 32], sizes = [8, 32], strides = [1, 1]} : vector<8x128xf32> to vector<8x32xf32>
    %353 = vector.extract_strided_slice %350 {offsets = [0, 96], sizes = [8, 32], strides = [1, 1]} : vector<8x128xf32> to vector<8x32xf32>
    %354 = vector.extract_strided_slice %345 {offsets = [0, 64], sizes = [8, 32], strides = [1, 1]} : vector<8x128xf32> to vector<8x32xf32>
    %355 = math.tanh %354 : vector<8x32xf32>
    %356 = arith.mulf %352, %338 : vector<8x32xf32>
    %357 = arith.mulf %351, %355 : vector<8x32xf32>
    %358 = arith.addf %356, %357 : vector<8x32xf32>
    %359 = math.tanh %358 : vector<8x32xf32>
    %360 = arith.mulf %353, %359 : vector<8x32xf32>
    %c7_i32_121 = arith.constant 7 : i32
    %361 = arith.index_cast %c7_i32_121 : i32 to index
    %c0_122 = arith.constant 0 : index
    %c0_123 = arith.constant 0 : index
    %362 = vector.load %arg11[%361, %c0_122, %c0_123] : memref<8x8x128xf32, #tpu.memory_space<vmem>>, vector<1x8x128xf32>
    %363 = vector.shape_cast %362 : vector<1x8x128xf32> to vector<8x128xf32>
    %cst_124 = arith.constant dense<0.000000e+00> : vector<8x128xf32>
    %364 = tpu.matmul %360, %7, %cst_124 {dimension_numbers = #tpu.dot_dimension_numbers<[1], [0], [0], [1], [0, 0, 1, 1], [], []>} : vector<8x32xf32>, vector<32x128xf32>, vector<8x128xf32> -> vector<8x128xf32>
    %365 = arith.addf %363, %364 : vector<8x128xf32>
    %366 = arith.negf %365 : vector<8x128xf32>
    %367 = math.exp %366 : vector<8x128xf32>
    %cst_125 = arith.constant 1.000000e+00 : f32
    %368 = vector.broadcast %cst_125 : f32 to vector<8x128xf32>
    %369 = arith.addf %368, %367 : vector<8x128xf32>
    %370 = arith.divf %368, %369 : vector<8x128xf32>
    %371 = vector.extract_strided_slice %370 {offsets = [0, 0], sizes = [8, 32], strides = [1, 1]} : vector<8x128xf32> to vector<8x32xf32>
    %372 = vector.extract_strided_slice %370 {offsets = [0, 32], sizes = [8, 32], strides = [1, 1]} : vector<8x128xf32> to vector<8x32xf32>
    %373 = vector.extract_strided_slice %370 {offsets = [0, 96], sizes = [8, 32], strides = [1, 1]} : vector<8x128xf32> to vector<8x32xf32>
    %374 = vector.extract_strided_slice %365 {offsets = [0, 64], sizes = [8, 32], strides = [1, 1]} : vector<8x128xf32> to vector<8x32xf32>
    %375 = math.tanh %374 : vector<8x32xf32>
    %376 = arith.mulf %372, %358 : vector<8x32xf32>
    %377 = arith.mulf %371, %375 : vector<8x32xf32>
    %378 = arith.addf %376, %377 : vector<8x32xf32>
    %379 = math.tanh %378 : vector<8x32xf32>
    %380 = arith.mulf %373, %379 : vector<8x32xf32>
    %c8_i32_126 = arith.constant 8 : i32
    %c0_127 = arith.constant 0 : index
    %c0_128 = arith.constant 0 : index
    %381 = vector.load %arg15[%c0_127, %c0_128] : memref<8x32xf32, #tpu.memory_space<vmem>>, vector<8x32xf32>
    tpu.vector_store %arg15[%c0_127, %c0_128], %380 {strides = array<i32>} : memref<8x32xf32, #tpu.memory_space<vmem>>, vector<8x32xf32>,
    %c0_129 = arith.constant 0 : index
    %c0_130 = arith.constant 0 : index
    %382 = vector.load %arg16[%c0_129, %c0_130] : memref<8x32xf32, #tpu.memory_space<vmem>>, vector<8x32xf32>
    tpu.vector_store %arg16[%c0_129, %c0_130], %378 {strides = array<i32>} : memref<8x32xf32, #tpu.memory_space<vmem>>, vector<8x32xf32>,
    %c0_i32_131 = arith.constant 0 : i32
    %383 = arith.cmpi eq, %arg0, %c0_i32_131 : i32
    %384 = arith.extui %383 : i1 to i32
    %c0_i32_132 = arith.constant 0 : i32
    %385 = arith.cmpi ne, %384, %c0_i32_132 : i32
    scf.if %385 {
      %c0_133 = arith.constant 0 : index
      %c0_134 = arith.constant 0 : index
      %386 = vector.load %arg15[%c0_133, %c0_134] : memref<8x32xf32, #tpu.memory_space<vmem>>, vector<8x32xf32>
      %c0_135 = arith.constant 0 : index
      %c0_136 = arith.constant 0 : index
      %387 = vector.load %arg8[%c0_135, %c0_136] : memref<32x4xf32, #tpu.memory_space<vmem>>, vector<32x4xf32>
      %cst_137 = arith.constant dense<0.000000e+00> : vector<8x4xf32>
      %388 = tpu.matmul %386, %387, %cst_137 {dimension_numbers = #tpu.dot_dimension_numbers<[1], [0], [0], [1], [0, 0, 1, 1], [], []>} : vector<8x32xf32>, vector<32x4xf32>, vector<8x4xf32> -> vector<8x4xf32>
      %c0_138 = arith.constant 0 : index
      %c0_139 = arith.constant 0 : index
      %389 = vector.load %arg9[%c0_138, %c0_139] : memref<1x4xf32, #tpu.memory_space<vmem>>, vector<1x4xf32>
      %390 = vector.broadcast %389 : vector<1x4xf32> to vector<8x4xf32>
      %391 = arith.addf %388, %390 : vector<8x4xf32>
      %c0_140 = arith.constant 0 : index
      %c0_141 = arith.constant 0 : index
      %392 = vector.load %arg10[%c0_140, %c0_141] : memref<8x4xf32, #tpu.memory_space<vmem>>, vector<8x4xf32>
      tpu.vector_store %arg10[%c0_140, %c0_141], %391 {strides = array<i32>} : memref<8x4xf32, #tpu.memory_space<vmem>>, vector<8x4xf32>,
    } else {
    }
    return
  }
  func.func @transform_0(%arg0: i32) -> (i32, i32, i32) {
    %c0_i32 = arith.constant 0 : i32
    %c0_i32_0 = arith.constant 0 : i32
    %c0_i32_1 = arith.constant 0 : i32
    return %arg0, %c0_i32, %c0_i32_0 : i32, i32, i32
  }
  func.func @transform_1(%arg0: i32) -> (i32, i32) {
    %c0_i32 = arith.constant 0 : i32
    %c0_i32_0 = arith.constant 0 : i32
    %c0_i32_1 = arith.constant 0 : i32
    return %c0_i32, %c0_i32_0 : i32, i32
  }
  func.func @transform_2(%arg0: i32) -> (i32, i32) {
    %c0_i32 = arith.constant 0 : i32
    %c0_i32_0 = arith.constant 0 : i32
    %c0_i32_1 = arith.constant 0 : i32
    return %c0_i32, %c0_i32_0 : i32, i32
  }
  func.func @transform_3(%arg0: i32) -> (i32, i32) {
    %c0_i32 = arith.constant 0 : i32
    %c0_i32_0 = arith.constant 0 : i32
    %c0_i32_1 = arith.constant 0 : i32
    return %c0_i32, %c0_i32_0 : i32, i32
  }
  func.func @transform_4(%arg0: i32) -> (i32, i32) {
    %c0_i32 = arith.constant 0 : i32
    %c0_i32_0 = arith.constant 0 : i32
    %c0_i32_1 = arith.constant 0 : i32
    return %c0_i32, %c0_i32_0 : i32, i32
  }
  func.func @transform_5(%arg0: i32) -> (i32, i32) {
    %c0_i32 = arith.constant 0 : i32
    %c0_i32_0 = arith.constant 0 : i32
    %c0_i32_1 = arith.constant 0 : i32
    return %c0_i32, %c0_i32_0 : i32, i32
  }
  func.func @transform_6(%arg0: i32) -> (i32, i32) {
    %c0_i32 = arith.constant 0 : i32
    %c0_i32_0 = arith.constant 0 : i32
    %c0_i32_1 = arith.constant 0 : i32
    return %c0_i32, %c0_i32_0 : i32, i32
  }
  func.func @transform_7(%arg0: i32) -> (i32, i32) {
    %c0_i32 = arith.constant 0 : i32
    %c0_i32_0 = arith.constant 0 : i32
    %c0_i32_1 = arith.constant 0 : i32
    return %c0_i32, %c0_i32_0 : i32, i32
  }
  func.func @transform_8(%arg0: i32) -> (i32, i32) {
    %c0_i32 = arith.constant 0 : i32
    %c0_i32_0 = arith.constant 0 : i32
    %c0_i32_1 = arith.constant 0 : i32
    return %c0_i32, %c0_i32_0 : i32, i32
  }
  func.func @transform_9(%arg0: i32) -> (i32, i32) {
    %c0_i32 = arith.constant 0 : i32
    %c0_i32_0 = arith.constant 0 : i32
    %c0_i32_1 = arith.constant 0 : i32
    return %c0_i32, %c0_i32_0 : i32, i32
  }
}

</mosaic_0001>

<llo_original>
// kernel: tpu_custom_call.1
$region0: #{tpu_custom_call.1}
  #allocation0 [shape = 'u32[]', space=smem, size = 0x4, offset = 0x4, fixed_abs, tag = 'smem constant byte address 0x4 - core index']
  #allocation1 [shape = 'u32[144,128]{1,0:T(1,128)}', space=vmem, size = 0x12000, scoped, tag = 'internal scratch']
  #allocation2 [shape = 'f32[8,8,128]{2,1,0:T(8,128)}', space=vmem, size = 0x8000, scoped, tag = 'scratch operand']
  #allocation3 [shape = 'f32[8,8,32]{2,1,0:T(8,128)}', space=vmem, size = 0x8000, scoped, tag = 'scratch operand']
  #allocation4 [shape = 'f32[8,32]{1,0:T(8,128)}', space=vmem, size = 0x1000, scoped, tag = 'scratch operand']
  #allocation5 [shape = 'f32[8,32]{1,0:T(8,128)}', space=vmem, size = 0x1000, scoped, tag = 'scratch operand']
  #allocation6 [shape = 'f32[8,32]{1,0:T(8,128)}', space=vmem, size = 0x1000, scoped, tag = 'scratch operand']
  #allocation7 [shape = 'f32[8,32]{1,0:T(8,128)}', space=vmem, size = 0x1000, scoped, tag = 'scratch operand']
  %s0 = inlined_call_operand.hbm [shape: f32[8,8,16], index: 0, kind: input, shape index: {}]
  %s1 = inlined_call_operand.hbm [shape: f32[16,128], index: 1, kind: input, shape index: {}]
  %s2 = inlined_call_operand.vmem [shape: f32[32,128], index: 2, kind: input, shape index: {}]
  %s3 = inlined_call_operand.vmem [shape: f32[1,128], index: 3, kind: input, shape index: {}]
  %s4 = inlined_call_operand.hbm [shape: f32[32,128], index: 4, kind: input, shape index: {}]
  %s5 = inlined_call_operand.hbm [shape: f32[32,128], index: 5, kind: input, shape index: {}]
  %s6 = inlined_call_operand.vmem [shape: f32[1,128], index: 6, kind: input, shape index: {}]
  %s7 = inlined_call_operand.vmem [shape: f32[32,4], index: 7, kind: input, shape index: {}]
  %s8 = inlined_call_operand.vmem [shape: f32[1,4], index: 8, kind: input, shape index: {}]
  %s9 = inlined_call_operand.vmem [shape: f32[8,4], index: 9, kind: output, shape index: {}]
  %s10 = sld [smem:[#allocation0]]
  $region70: #{tpu_custom_call.1} parent=0
    _
  %s12 = ssub.s32 1, %s10
  %s13 = scalar_select 0, %s12, %s10
  $region1: #{tpu_custom_call.1} parent=0
    #allocation8 [shape = 'u8[32768]{0}', space=vmem, size = 0x8000, scoped, tag = 'input window, operand 0, single buffered']
    #allocation9 [shape = 's32[1]{0}', space=sflag, size = 0x4, scoped, tag = 'scoped memory for tpu_custom_call.1']
    #allocation10 [shape = 'u8[8192]{0}', space=vmem, size = 0x2000, scoped, tag = 'input window, operand 1, single buffered']
    #allocation11 [shape = 's32[1]{0}', space=sflag, size = 0x4, scoped, tag = 'scoped memory for tpu_custom_call.1']
    #allocation12 [shape = 'u8[16384]{0}', space=vmem, size = 0x4000, scoped, tag = 'input window, operand 4, single buffered']
    #allocation13 [shape = 'u8[16384]{0}', space=vmem, size = 0x4000, scoped, tag = 'input window, operand 5, single buffered']
    #allocation14 [shape = 's32[1]{0}', space=sflag, size = 0x4, scoped, tag = 'scoped memory for tpu_custom_call.1']
    %14 = vsyncpa [#allocation9], 0
    %15 = vsyncpa [#allocation11], 0
    %16 = vsyncpa [#allocation14], 0
    // Predicated region
    $region2: #{tpu_custom_call.1} parent=1 // pred_check
      _
    $region3: #{tpu_custom_call.1} parent=1 // pred_check_branch
      %18 = sbr.rel (0) target = $region5
    $region4: #{tpu_custom_call.1} parent=1 // pred_region
      %s20 = ssub.s32 1024, 1024
      %21 = vsyncadd [#allocation9], %s20
      %s22 = sshll.u32 [#allocation8], 4
      %s23 = int_to_ptr.vmem [resolvable:$true] %s22
      %28 = dma.hbm_to_vmem [thread:$0]  %s0, 1024, %s23, [#allocation9], 128, 128, 8
    $region5: #{tpu_custom_call.1} parent=1 // pred_fallthru
      _
    // Predicated region
    $region6: #{tpu_custom_call.1} parent=1 // pred_check
      _
    $region7: #{tpu_custom_call.1} parent=1 // pred_check_branch
      %30 = sbr.rel (0) target = $region9
    $region8: #{tpu_custom_call.1} parent=1 // pred_region
      %s32 = ssub.s32 256, 256
      %33 = vsyncadd [#allocation11], %s32
      %s34 = sshll.u32 [#allocation10], 4
      %s35 = int_to_ptr.vmem [resolvable:$true] %s34
      %40 = dma.hbm_to_vmem [thread:$0]  %s1, 256, %s35, [#allocation11], 128, 128, 8
    $region9: #{tpu_custom_call.1} parent=1 // pred_fallthru
      _
    // Predicated region
    $region10: #{tpu_custom_call.1} parent=1 // pred_check
      _
    $region11: #{tpu_custom_call.1} parent=1 // pred_check_branch
      %42 = sbr.rel (0) target = $region13
    $region12: #{tpu_custom_call.1} parent=1 // pred_region
      _
    $region13: #{tpu_custom_call.1} parent=1 // pred_fallthru
      _
    // Predicated region
    $region14: #{tpu_custom_call.1} parent=1 // pred_check
      _
    $region15: #{tpu_custom_call.1} parent=1 // pred_check_branch
      %44 = sbr.rel (0) target = $region17
    $region16: #{tpu_custom_call.1} parent=1 // pred_region
      _
    $region17: #{tpu_custom_call.1} parent=1 // pred_fallthru
      _
    // Predicated region
    $region18: #{tpu_custom_call.1} parent=1 // pred_check
      _
    $region19: #{tpu_custom_call.1} parent=1 // pred_check_branch
      %46 = sbr.rel (0) target = $region21
    $region20: #{tpu_custom_call.1} parent=1 // pred_region
      %s48 = ssub.s32 512, 512
      %49 = vsyncadd [#allocation11], %s48
      %s50 = sshll.u32 [#allocation12], 4
      %s51 = int_to_ptr.vmem [resolvable:$true] %s50
      %56 = dma.hbm_to_vmem [thread:$0]  %s4, 512, %s51, [#allocation11], 128, 128, 8
    $region21: #{tpu_custom_call.1} parent=1 // pred_fallthru
      _
    // Predicated region
    $region22: #{tpu_custom_call.1} parent=1 // pred_check
      _
    $region23: #{tpu_custom_call.1} parent=1 // pred_check_branch
      %58 = sbr.rel (0) target = $region25
    $region24: #{tpu_custom_call.1} parent=1 // pred_region
      %s60 = ssub.s32 512, 512
      %61 = vsyncadd [#allocation14], %s60
      %s62 = sshll.u32 [#allocation13], 4
      %s63 = int_to_ptr.vmem [resolvable:$true] %s62
      %68 = dma.hbm_to_vmem [thread:$0]  %s5, 512, %s63, [#allocation14], 128, 128, 8
    $region25: #{tpu_custom_call.1} parent=1 // pred_fallthru
      _
    // Predicated region
    $region26: #{tpu_custom_call.1} parent=1 // pred_check
      _
    $region27: #{tpu_custom_call.1} parent=1 // pred_check_branch
      %70 = sbr.rel (0) target = $region29
    $region28: #{tpu_custom_call.1} parent=1 // pred_region
      _
    $region29: #{tpu_custom_call.1} parent=1 // pred_fallthru
      _
    // Predicated region
    $region30: #{tpu_custom_call.1} parent=1 // pred_check
      _
    $region31: #{tpu_custom_call.1} parent=1 // pred_check_branch
      %72 = sbr.rel (0) target = $region33
    $region32: #{tpu_custom_call.1} parent=1 // pred_region
      _
    $region33: #{tpu_custom_call.1} parent=1 // pred_fallthru
      _
    // Predicated region
    $region34: #{tpu_custom_call.1} parent=1 // pred_check
      _
    $region35: #{tpu_custom_call.1} parent=1 // pred_check_branch
      %74 = sbr.rel (0) target = $region37
    $region36: #{tpu_custom_call.1} parent=1 // pred_region
      _
    $region37: #{tpu_custom_call.1} parent=1 // pred_fallthru
      _
    // Predicated region
    $region38: #{tpu_custom_call.1} parent=1 // pred_check
      _
    $region39: #{tpu_custom_call.1} parent=1 // pred_check_branch
      %76 = sbr.rel (0) target = $region41
    $region40: #{tpu_custom_call.1} parent=1 // pred_region
      %77 = dma.done [#allocation9], 1024
    $region41: #{tpu_custom_call.1} parent=1 // pred_fallthru
      _
    // Predicated region
    $region42: #{tpu_custom_call.1} parent=1 // pred_check
      _
    $region43: #{tpu_custom_call.1} parent=1 // pred_check_branch
      %79 = sbr.rel (0) target = $region45
    $region44: #{tpu_custom_call.1} parent=1 // pred_region
      %80 = dma.done [#allocation11], 256
    $region45: #{tpu_custom_call.1} parent=1 // pred_fallthru
      _
    // Predicated region
    $region46: #{tpu_custom_call.1} parent=1 // pred_check
      _
    $region47: #{tpu_custom_call.1} parent=1 // pred_check_branch
      %82 = sbr.rel (0) target = $region49
    $region48: #{tpu_custom_call.1} parent=1 // pred_region
      %83 = dma.done [#allocation11], 512
    $region49: #{tpu_custom_call.1} parent=1 // pred_fallthru
      _
    // Predicated region
    $region50: #{tpu_custom_call.1} parent=1 // pred_check
      _
    $region51: #{tpu_custom_call.1} parent=1 // pred_check_branch
      %85 = sbr.rel (0) target = $region53
    $region52: #{tpu_custom_call.1} parent=1 // pred_region
      %86 = dma.done [#allocation14], 512
    $region53: #{tpu_custom_call.1} parent=1 // pred_fallthru
      _
    %p87 = scmp.eq.s32.totalorder 0, 0
    // Predicated region
    $region54: #{tpu_custom_call.1} parent=1 // pred_check
      %p88 = pneg %p87
    $region55: #{tpu_custom_call.1} parent=1 // pred_check_branch
      %90 = sbr.rel (%p88) target = $region57
    $region56: #{tpu_custom_call.1} parent=1 // pred_region
      %vm91 = vcmask 261120
      %92 = vst.msk [vmem:[#allocation4] sm:$0xff] %vm91, 0.0
      %93 = vst.msk [vmem:[#allocation5] sm:$0xff] %vm91, 0.0
      %94 = vst.msk [vmem:[#allocation6] sm:$0xff] %vm91, 0.0
      %95 = vst.msk [vmem:[#allocation7] sm:$0xff] %vm91, 0.0
    $region57: #{tpu_custom_call.1} parent=1 // pred_fallthru
      _
    %v96 = vld [vmem:[#allocation10] sm:$0xff]
    %v97 = vld [vmem:[#allocation10 + $0x8] sm:$0xff]
    %v98 = vld [vmem:[%s2] sm:$0xff]
    %v99 = vld [vmem:[%s2 + $0x8] sm:$0xff]
    %v100 = vld [vmem:[%s2 + $0x10] sm:$0xff]
    %v101 = vld [vmem:[%s2 + $0x18] sm:$0xff]
    %v102 = vld [vmem:[%s3] sm:$0x1]
    %v103 = vld [vmem:[#allocation12] sm:$0xff]
    %v104 = vld [vmem:[#allocation12 + $0x8] sm:$0xff]
    %v105 = vld [vmem:[#allocation12 + $0x10] sm:$0xff]
    %v106 = vld [vmem:[#allocation12 + $0x18] sm:$0xff]
    %v107 = vld [vmem:[#allocation13] sm:$0xff]
    %v108 = vld [vmem:[#allocation13 + $0x8] sm:$0xff]
    %v109 = vld [vmem:[#allocation13 + $0x10] sm:$0xff]
    %v110 = vld [vmem:[#allocation13 + $0x18] sm:$0xff]
    %v111 = vld [vmem:[%s6] sm:$0x1]
    %v112 = vld [vmem:[#allocation8] sm:$0xff]
    %v113 = vld [vmem:[#allocation8 + $0x8] sm:$0xff]
    %v114 = vld [vmem:[#allocation8 + $0x10] sm:$0xff]
    %v115 = vld [vmem:[#allocation8 + $0x18] sm:$0xff]
    %v116 = vld [vmem:[#allocation8 + $0x20] sm:$0xff]
    %v117 = vld [vmem:[#allocation8 + $0x28] sm:$0xff]
    %v118 = vld [vmem:[#allocation8 + $0x30] sm:$0xff]
    %v119 = vld [vmem:[#allocation8 + $0x38] sm:$0xff]
    %v121 = vlaneseq
    %v122 = vshrl.u32 %v121, 7
    %v123 = vsub.s32 0, %v122
    %v124 = vrot.slane %v102, %v123
    %vm126 = vcmask 130048
    %v128 = vsel %vm126, %v112, 0
    %v131 = vsel %vm126, %v113, 0
    %v134 = vsel %vm126, %v114, 0
    %v137 = vsel %vm126, %v115, 0
    %v140 = vsel %vm126, %v116, 0
    %v143 = vsel %vm126, %v117, 0
    %v146 = vsel %vm126, %v118, 0
    %v149 = vsel %vm126, %v119, 0
    %151 = vmatprep.subr.mxu0 0.0
    %152 = vmatpush1.msra.mxu0 %v96
    %153 = vmatprep.subr.mxu0 0.0
    %154 = vmatpush1.msra.mxu0 %v97
    %155 = vmatprep.subr.mxu0 0.0
    %156 = vmatpush1.msra.mxu0 0.0
    %157 = vmatprep.subr.mxu0 0.0
    %158 = vmatpush1.msra.mxu0 0.0
    %159 = vmatprep.subr.mxu0 0.0
    %160 = vmatpush1.msra.mxu0 0.0
    %161 = vmatprep.subr.mxu0 0.0
    %162 = vmatpush1.msra.mxu0 0.0
    %163 = vmatprep.subr.mxu0 0.0
    %164 = vmatpush1.msra.mxu0 0.0
    %165 = vmatprep.subr.mxu0 0.0
    %166 = vmatpush1.msra.mxu0 0.0
    %167 = vmatprep.subr.mxu0 0.0
    %168 = vmatpush1.msra.mxu0 0.0
    %169 = vmatprep.subr.mxu0 0.0
    %170 = vmatpush1.msra.mxu0 0.0
    %171 = vmatprep.subr.mxu0 0.0
    %172 = vmatpush1.msra.mxu0 0.0
    %173 = vmatprep.subr.mxu0 0.0
    %174 = vmatpush1.msra.mxu0 0.0
    %175 = vmatprep.subr.mxu0 0.0
    %176 = vmatpush1.msra.mxu0 0.0
    %177 = vmatprep.subr.mxu0 0.0
    %178 = vmatpush1.msra.mxu0 0.0
    %179 = vmatprep.subr.mxu0 0.0
    %180 = vmatpush1.msra.mxu0 0.0
    %181 = vmatprep.subr.mxu0 0.0
    %182 = vmatpush1.msra.mxu0 0.0
    %183 = vmatprep.subr.mxu0 0.0
    %184 = vmatpush1.msra.mxu0 0.0
    %185 = vmatprep.subr.mxu0 0.0
    %186 = vmatpush1.msra.mxu0 0.0
    %187 = vmatprep.subr.mxu0 0.0
    %188 = vmatpush1.msra.mxu0 0.0
    %189 = vmatprep.subr.mxu0 0.0
    %190 = vmatpush1.msra.mxu0 0.0
    %191 = vmatprep.subr.mxu0 0.0
    %192 = vmatpush1.msra.mxu0 0.0
    %193 = vmatprep.subr.mxu0 0.0
    %194 = vmatpush1.msra.mxu0 0.0
    %195 = vmatprep.subr.mxu0 0.0
    %196 = vmatpush1.msra.mxu0 0.0
    %197 = vmatprep.subr.mxu0 0.0
    %198 = vmatpush1.msra.mxu0 0.0
    %199 = vmatprep.subr.mxu0 0.0
    %200 = vmatpush1.msra.mxu0 0.0
    %201 = vmatprep.subr.mxu0 0.0
    %202 = vmatpush1.msra.mxu0 0.0
    %203 = vmatprep.subr.mxu0 0.0
    %204 = vmatpush1.msra.mxu0 0.0
    %205 = vmatprep.subr.mxu0 0.0
    %206 = vmatpush1.msra.mxu0 0.0
    %207 = vmatprep.subr.mxu0 0.0
    %208 = vmatpush1.msra.mxu0 0.0
    %209 = vmatprep.subr.mxu0 0.0
    %210 = vmatpush1.msra.mxu0 0.0
    %211 = vmatprep.subr.mxu0 0.0
    %212 = vmatpush1.msra.mxu0 0.0
    %213 = vmatprep.subr.mxu0 0.0
    %214 = vmatpush1.msra.mxu0 0.0
    %215 = vmatprep.mubr.f32.mxu0 0.0
    %216 = vmatmul.mubr.f32.gmra.mrb[0].mxu0 %v128
    %v217 = vpop.f32.mrb[0].mxu0
    %v218 = vadd.f32 %v124, %v217
    %v219 = vpop.f32.mrb[0].mxu0
    %220 = vmatprep.mubr.f32.mxu0 0.0
    %221 = vmatmul.mubr.f32.gmra.mrb[0].mxu0 %v131
    %v222 = vpop.f32.mrb[0].mxu0
    %v223 = vadd.f32 %v124, %v222
    %v224 = vpop.f32.mrb[0].mxu0
    %225 = vmatprep.mubr.f32.mxu0 0.0
    %226 = vmatmul.mubr.f32.gmra.mrb[0].mxu0 %v134
    %v227 = vpop.f32.mrb[0].mxu0
    %v228 = vadd.f32 %v124, %v227
    %v229 = vpop.f32.mrb[0].mxu0
    %230 = vmatprep.mubr.f32.mxu0 0.0
    %231 = vmatmul.mubr.f32.gmra.mrb[0].mxu0 %v137
    %v232 = vpop.f32.mrb[0].mxu0
    %v233 = vadd.f32 %v124, %v232
    %v234 = vpop.f32.mrb[0].mxu0
    %235 = vmatprep.mubr.f32.mxu0 0.0
    %236 = vmatmul.mubr.f32.gmra.mrb[0].mxu0 %v140
    %v237 = vpop.f32.mrb[0].mxu0
    %v238 = vadd.f32 %v124, %v237
    %v239 = vpop.f32.mrb[0].mxu0
    %240 = vmatprep.mubr.f32.mxu0 0.0
    %241 = vmatmul.mubr.f32.gmra.mrb[0].mxu0 %v143
    %v242 = vpop.f32.mrb[0].mxu0
    %v243 = vadd.f32 %v124, %v242
    %v244 = vpop.f32.mrb[0].mxu0
    %245 = vmatprep.mubr.f32.mxu0 0.0
    %246 = vmatmul.mubr.f32.gmra.mrb[0].mxu0 %v146
    %v247 = vpop.f32.mrb[0].mxu0
    %v248 = vadd.f32 %v124, %v247
    %v249 = vpop.f32.mrb[0].mxu0
    %250 = vmatprep.mubr.f32.mxu0 0.0
    %251 = vmatmul.mubr.f32.gmra.mrb[0].mxu0 %v149
    %v252 = vpop.f32.mrb[0].mxu0
    %v253 = vadd.f32 %v124, %v252
    %v254 = vpop.f32.mrb[0].mxu0
    %255 = vdwg.mxu0
    %256 = vst [vmem:[#allocation2] sm:$0xff] %v218
    %257 = vst [vmem:[#allocation2 + $0x8] sm:$0xff] %v223
    %258 = vst [vmem:[#allocation2 + $0x10] sm:$0xff] %v228
    %259 = vst [vmem:[#allocation2 + $0x18] sm:$0xff] %v233
    %260 = vst [vmem:[#allocation2 + $0x20] sm:$0xff] %v238
    %261 = vst [vmem:[#allocation2 + $0x28] sm:$0xff] %v243
    %262 = vst [vmem:[#allocation2 + $0x30] sm:$0xff] %v248
    %263 = vst [vmem:[#allocation2 + $0x38] sm:$0xff] %v253
    %v264 = vld [vmem:[#allocation4] sm:$0xff]
    %v265 = vld [vmem:[#allocation5] sm:$0xff]
    %v266 = vld [vmem:[#allocation2] sm:$0xff]
    %vm267 = vcmask 261120
    %v269 = vsel %vm267, %v264, 0
    %271 = vmatprep.subr.mxu0 0.0
    %272 = vmatpush1.msra.mxu0 %v98
    %273 = vmatprep.subr.mxu0 0.0
    %274 = vmatpush1.msra.mxu0 %v99
    %275 = vmatprep.subr.mxu0 0.0
    %276 = vmatpush1.msra.mxu0 %v100
    %277 = vmatprep.subr.mxu0 0.0
    %278 = vmatpush1.msra.mxu0 %v101
    %279 = vmatprep.subr.mxu0 0.0
    %280 = vmatpush1.msra.mxu0 0.0
    %281 = vmatprep.subr.mxu0 0.0
    %282 = vmatpush1.msra.mxu0 0.0
    %283 = vmatprep.subr.mxu0 0.0
    %284 = vmatpush1.msra.mxu0 0.0
    %285 = vmatprep.subr.mxu0 0.0
    %286 = vmatpush1.msra.mxu0 0.0
    %287 = vmatprep.subr.mxu0 0.0
    %288 = vmatpush1.msra.mxu0 0.0
    %289 = vmatprep.subr.mxu0 0.0
    %290 = vmatpush1.msra.mxu0 0.0
    %291 = vmatprep.subr.mxu0 0.0
    %292 = vmatpush1.msra.mxu0 0.0
    %293 = vmatprep.subr.mxu0 0.0
    %294 = vmatpush1.msra.mxu0 0.0
    %295 = vmatprep.subr.mxu0 0.0
    %296 = vmatpush1.msra.mxu0 0.0
    %297 = vmatprep.subr.mxu0 0.0
    %298 = vmatpush1.msra.mxu0 0.0
    %299 = vmatprep.subr.mxu0 0.0
    %300 = vmatpush1.msra.mxu0 0.0
    %301 = vmatprep.subr.mxu0 0.0
    %302 = vmatpush1.msra.mxu0 0.0
    %303 = vmatprep.subr.mxu0 0.0
    %304 = vmatpush1.msra.mxu0 0.0
    %305 = vmatprep.subr.mxu0 0.0
    %306 = vmatpush1.msra.mxu0 0.0
    %307 = vmatprep.subr.mxu0 0.0
    %308 = vmatpush1.msra.mxu0 0.0
    %309 = vmatprep.subr.mxu0 0.0
    %310 = vmatpush1.msra.mxu0 0.0
    %311 = vmatprep.subr.mxu0 0.0
    %312 = vmatpush1.msra.mxu0 0.0
    %313 = vmatprep.subr.mxu0 0.0
    %314 = vmatpush1.msra.mxu0 0.0
    %315 = vmatprep.subr.mxu0 0.0
    %316 = vmatpush1.msra.mxu0 0.0
    %317 = vmatprep.subr.mxu0 0.0
    %318 = vmatpush1.msra.mxu0 0.0
    %319 = vmatprep.subr.mxu0 0.0
    %320 = vmatpush1.msra.mxu0 0.0
    %321 = vmatprep.subr.mxu0 0.0
    %322 = vmatpush1.msra.mxu0 0.0
    %323 = vmatprep.subr.mxu0 0.0
    %324 = vmatpush1.msra.mxu0 0.0
    %325 = vmatprep.subr.mxu0 0.0
    %326 = vmatpush1.msra.mxu0 0.0
    %327 = vmatprep.subr.mxu0 0.0
    %328 = vmatpush1.msra.mxu0 0.0
    %329 = vmatprep.subr.mxu0 0.0
    %330 = vmatpush1.msra.mxu0 0.0
    %331 = vmatprep.subr.mxu0 0.0
    %332 = vmatpush1.msra.mxu0 0.0
    %333 = vmatprep.subr.mxu0 0.0
    %334 = vmatpush1.msra.mxu0 0.0
    %335 = vmatprep.mubr.f32.mxu0 0.0
    %336 = vmatmul.mubr.f32.gmra.mrb[0].mxu0 %v269
    %v337 = vpop.f32.mrb[0].mxu0
    %v338 = vadd.f32 0.0, %v337
    %v339 = vpop.f32.mrb[0].mxu0
    %340 = vdwg.mxu0
    %v341 = vadd.f32 %v266, %v338
    %v342 = vxor.u32 %v341, 2147483648
    %v343 = vmul.f32 %v342, 1.442695
    %v344 = vpow.pop %v343
    %v345 = vadd.f32 %v344, 1.0
    %v346 = vrcp.pop %v345
    %v347 = vmul.f32 1.0, %v346
    %v348 = vtanh.pop %v341
    %350 = vrot.lane.b32.xlu0 %v265, 32
    %v351 = vpop.permute.xlu0 %350
    %v353 = vmul.f32 %v347, %v351
    %355 = vrot.lane.b32.xlu0 %v348, 64
    %v356 = vpop.permute.xlu0 %355
    %v358 = vmul.f32 %v347, %v356
    %360 = vrot.lane.b32.xlu0 %v358, 32
    %v361 = vpop.permute.xlu0 %360
    %v363 = vadd.f32 %v353, %v361
    %v364 = vtanh.pop %v363
    %366 = vrot.lane.b32.xlu0 %v364, 64
    %v367 = vpop.permute.xlu0 %366
    %v369 = vmul.f32 %v347, %v367
    %371 = vrot.lane.b32.xlu0 %v369, 32
    %v372 = vpop.permute.xlu0 %371
    %374 = vst.msk [vmem:[#allocation3] sm:$0xff] %vm267, %v372
    %s375 = scalar_lea.vmem [#allocation2], 8
    %v376 = vld [vmem:[%s375] sm:$0xff]
    %v377 = vsel %vm267, %v372, 0
    %379 = vmatprep.subr.mxu0 0.0
    %380 = vmatpush1.msra.mxu0 %v98
    %381 = vmatprep.subr.mxu0 0.0
    %382 = vmatpush1.msra.mxu0 %v99
    %383 = vmatprep.subr.mxu0 0.0
    %384 = vmatpush1.msra.mxu0 %v100
    %385 = vmatprep.subr.mxu0 0.0
    %386 = vmatpush1.msra.mxu0 %v101
    %387 = vmatprep.subr.mxu0 0.0
    %388 = vmatpush1.msra.mxu0 0.0
    %389 = vmatprep.subr.mxu0 0.0
    %390 = vmatpush1.msra.mxu0 0.0
    %391 = vmatprep.subr.mxu0 0.0
    %392 = vmatpush1.msra.mxu0 0.0
    %393 = vmatprep.subr.mxu0 0.0
    %394 = vmatpush1.msra.mxu0 0.0
    %395 = vmatprep.subr.mxu0 0.0
    %396 = vmatpush1.msra.mxu0 0.0
    %397 = vmatprep.subr.mxu0 0.0
    %398 = vmatpush1.msra.mxu0 0.0
    %399 = vmatprep.subr.mxu0 0.0
    %400 = vmatpush1.msra.mxu0 0.0
    %401 = vmatprep.subr.mxu0 0.0
    %402 = vmatpush1.msra.mxu0 0.0
    %403 = vmatprep.subr.mxu0 0.0
    %404 = vmatpush1.msra.mxu0 0.0
    %405 = vmatprep.subr.mxu0 0.0
    %406 = vmatpush1.msra.mxu0 0.0
    %407 = vmatprep.subr.mxu0 0.0
    %408 = vmatpush1.msra.mxu0 0.0
    %409 = vmatprep.subr.mxu0 0.0
    %410 = vmatpush1.msra.mxu0 0.0
    %411 = vmatprep.subr.mxu0 0.0
    %412 = vmatpush1.msra.mxu0 0.0
    %413 = vmatprep.subr.mxu0 0.0
    %414 = vmatpush1.msra.mxu0 0.0
    %415 = vmatprep.subr.mxu0 0.0
    %416 = vmatpush1.msra.mxu0 0.0
    %417 = vmatprep.subr.mxu0 0.0
    %418 = vmatpush1.msra.mxu0 0.0
    %419 = vmatprep.subr.mxu0 0.0
    %420 = vmatpush1.msra.mxu0 0.0
    %421 = vmatprep.subr.mxu0 0.0
    %422 = vmatpush1.msra.mxu0 0.0
    %423 = vmatprep.subr.mxu0 0.0
    %424 = vmatpush1.msra.mxu0 0.0
    %425 = vmatprep.subr.mxu0 0.0
    %426 = vmatpush1.msra.mxu0 0.0
    %427 = vmatprep.subr.mxu0 0.0
    %428 = vmatpush1.msra.mxu0 0.0
    %429 = vmatprep.subr.mxu0 0.0
    %430 = vmatpush1.msra.mxu0 0.0
    %431 = vmatprep.subr.mxu0 0.0
    %432 = vmatpush1.msra.mxu0 0.0
    %433 = vmatprep.subr.mxu0 0.0
    %434 = vmatpush1.msra.mxu0 0.0
    %435 = vmatprep.subr.mxu0 0.0
    %436 = vmatpush1.msra.mxu0 0.0
    %437 = vmatprep.subr.mxu0 0.0
    %438 = vmatpush1.msra.mxu0 0.0
    %439 = vmatprep.subr.mxu0 0.0
    %440 = vmatpush1.msra.mxu0 0.0
    %441 = vmatprep.subr.mxu0 0.0
    %442 = vmatpush1.msra.mxu0 0.0
    %443 = vmatprep.mubr.f32.mxu0 0.0
    %444 = vmatmul.mubr.f32.gmra.mrb[0].mxu0 %v377
    %v445 = vpop.f32.mrb[0].mxu0
    %v446 = vadd.f32 0.0, %v445
    %v447 = vpop.f32.mrb[0].mxu0
    %448 = vdwg.mxu0
    %v449 = vadd.f32 %v376, %v446
    %v450 = vxor.u32 %v449, 2147483648
    %v451 = vmul.f32 %v450, 1.442695
    %v452 = vpow.pop %v451
    %v453 = vadd.f32 %v452, 1.0
    %v454 = vrcp.pop %v453
    %v455 = vmul.f32 1.0, %v454
    %v456 = vtanh.pop %v449
    %v457 = vmul.f32 %v455, %v363
    %459 = vrot.lane.b32.xlu0 %v456, 64
    %v460 = vpop.permute.xlu0 %459
    %v462 = vmul.f32 %v455, %v460
    %464 = vrot.lane.b32.xlu0 %v462, 32
    %v465 = vpop.permute.xlu0 %464
    %v467 = vadd.f32 %v457, %v465
    %v468 = vtanh.pop %v467
    %470 = vrot.lane.b32.xlu0 %v468, 64
    %v471 = vpop.permute.xlu0 %470
    %v473 = vmul.f32 %v455, %v471
    %475 = vrot.lane.b32.xlu0 %v473, 32
    %v476 = vpop.permute.xlu0 %475
    %s478 = scalar_lea.vmem [#allocation3], 8
    %479 = vst.msk [vmem:[%s478] sm:$0xff] %vm267, %v476
    %s480 = scalar_lea.vmem [#allocation2], 16
    %v481 = vld [vmem:[%s480] sm:$0xff]
    %v482 = vsel %vm267, %v476, 0
    %484 = vmatprep.subr.mxu0 0.0
    %485 = vmatpush1.msra.mxu0 %v98
    %486 = vmatprep.subr.mxu0 0.0
    %487 = vmatpush1.msra.mxu0 %v99
    %488 = vmatprep.subr.mxu0 0.0
    %489 = vmatpush1.msra.mxu0 %v100
    %490 = vmatprep.subr.mxu0 0.0
    %491 = vmatpush1.msra.mxu0 %v101
    %492 = vmatprep.subr.mxu0 0.0
    %493 = vmatpush1.msra.mxu0 0.0
    %494 = vmatprep.subr.mxu0 0.0
    %495 = vmatpush1.msra.mxu0 0.0
    %496 = vmatprep.subr.mxu0 0.0
    %497 = vmatpush1.msra.mxu0 0.0
    %498 = vmatprep.subr.mxu0 0.0
    %499 = vmatpush1.msra.mxu0 0.0
    %500 = vmatprep.subr.mxu0 0.0
    %501 = vmatpush1.msra.mxu0 0.0
    %502 = vmatprep.subr.mxu0 0.0
    %503 = vmatpush1.msra.mxu0 0.0
    %504 = vmatprep.subr.mxu0 0.0
    %505 = vmatpush1.msra.mxu0 0.0
    %506 = vmatprep.subr.mxu0 0.0
    %507 = vmatpush1.msra.mxu0 0.0
    %508 = vmatprep.subr.mxu0 0.0
    %509 = vmatpush1.msra.mxu0 0.0
    %510 = vmatprep.subr.mxu0 0.0
    %511 = vmatpush1.msra.mxu0 0.0
    %512 = vmatprep.subr.mxu0 0.0
    %513 = vmatpush1.msra.mxu0 0.0
    %514 = vmatprep.subr.mxu0 0.0
    %515 = vmatpush1.msra.mxu0 0.0
    %516 = vmatprep.subr.mxu0 0.0
    %517 = vmatpush1.msra.mxu0 0.0
    %518 = vmatprep.subr.mxu0 0.0
    %519 = vmatpush1.msra.mxu0 0.0
    %520 = vmatprep.subr.mxu0 0.0
    %521 = vmatpush1.msra.mxu0 0.0
    %522 = vmatprep.subr.mxu0 0.0
    %523 = vmatpush1.msra.mxu0 0.0
    %524 = vmatprep.subr.mxu0 0.0
    %525 = vmatpush1.msra.mxu0 0.0
    %526 = vmatprep.subr.mxu0 0.0
    %527 = vmatpush1.msra.mxu0 0.0
    %528 = vmatprep.subr.mxu0 0.0
    %529 = vmatpush1.msra.mxu0 0.0
    %530 = vmatprep.subr.mxu0 0.0
    %531 = vmatpush1.msra.mxu0 0.0
    %532 = vmatprep.subr.mxu0 0.0
    %533 = vmatpush1.msra.mxu0 0.0
    %534 = vmatprep.subr.mxu0 0.0
    %535 = vmatpush1.msra.mxu0 0.0
    %536 = vmatprep.subr.mxu0 0.0
    %537 = vmatpush1.msra.mxu0 0.0
    %538 = vmatprep.subr.mxu0 0.0
    %539 = vmatpush1.msra.mxu0 0.0
    %540 = vmatprep.subr.mxu0 0.0
    %541 = vmatpush1.msra.mxu0 0.0
    %542 = vmatprep.subr.mxu0 0.0
    %543 = vmatpush1.msra.mxu0 0.0
    %544 = vmatprep.subr.mxu0 0.0
    %545 = vmatpush1.msra.mxu0 0.0
    %546 = vmatprep.subr.mxu0 0.0
    %547 = vmatpush1.msra.mxu0 0.0
    %548 = vmatprep.mubr.f32.mxu0 0.0
    %549 = vmatmul.mubr.f32.gmra.mrb[0].mxu0 %v482
    %v550 = vpop.f32.mrb[0].mxu0
    %v551 = vadd.f32 0.0, %v550
    %v552 = vpop.f32.mrb[0].mxu0
    %553 = vdwg.mxu0
    %v554 = vadd.f32 %v481, %v551
    %v555 = vxor.u32 %v554, 2147483648
    %v556 = vmul.f32 %v555, 1.442695
    %v557 = vpow.pop %v556
    %v558 = vadd.f32 %v557, 1.0
    %v559 = vrcp.pop %v558
    %v560 = vmul.f32 1.0, %v559
    %v561 = vtanh.pop %v554
    %v562 = vmul.f32 %v560, %v467
    %564 = vrot.lane.b32.xlu0 %v561, 64
    %v565 = vpop.permute.xlu0 %564
    %v567 = vmul.f32 %v560, %v565
    %569 = vrot.lane.b32.xlu0 %v567, 32
    %v570 = vpop.permute.xlu0 %569
    %v572 = vadd.f32 %v562, %v570
    %v573 = vtanh.pop %v572
    %575 = vrot.lane.b32.xlu0 %v573, 64
    %v576 = vpop.permute.xlu0 %575
    %v578 = vmul.f32 %v560, %v576
    %580 = vrot.lane.b32.xlu0 %v578, 32
    %v581 = vpop.permute.xlu0 %580
    %s583 = scalar_lea.vmem [#allocation3], 16
    %584 = vst.msk [vmem:[%s583] sm:$0xff] %vm267, %v581
    %s585 = scalar_lea.vmem [#allocation2], 24
    %v586 = vld [vmem:[%s585] sm:$0xff]
    %v587 = vsel %vm267, %v581, 0
    %589 = vmatprep.subr.mxu0 0.0
    %590 = vmatpush1.msra.mxu0 %v98
    %591 = vmatprep.subr.mxu0 0.0
    %592 = vmatpush1.msra.mxu0 %v99
    %593 = vmatprep.subr.mxu0 0.0
    %594 = vmatpush1.msra.mxu0 %v100
    %595 = vmatprep.subr.mxu0 0.0
    %596 = vmatpush1.msra.mxu0 %v101
    %597 = vmatprep.subr.mxu0 0.0
    %598 = vmatpush1.msra.mxu0 0.0
    %599 = vmatprep.subr.mxu0 0.0
    %600 = vmatpush1.msra.mxu0 0.0
    %601 = vmatprep.subr.mxu0 0.0
    %602 = vmatpush1.msra.mxu0 0.0
    %603 = vmatprep.subr.mxu0 0.0
    %604 = vmatpush1.msra.mxu0 0.0
    %605 = vmatprep.subr.mxu0 0.0
    %606 = vmatpush1.msra.mxu0 0.0
    %607 = vmatprep.subr.mxu0 0.0
    %608 = vmatpush1.msra.mxu0 0.0
    %609 = vmatprep.subr.mxu0 0.0
    %610 = vmatpush1.msra.mxu0 0.0
    %611 = vmatprep.subr.mxu0 0.0
    %612 = vmatpush1.msra.mxu0 0.0
    %613 = vmatprep.subr.mxu0 0.0
    %614 = vmatpush1.msra.mxu0 0.0
    %615 = vmatprep.subr.mxu0 0.0
    %616 = vmatpush1.msra.mxu0 0.0
    %617 = vmatprep.subr.mxu0 0.0
    %618 = vmatpush1.msra.mxu0 0.0
    %619 = vmatprep.subr.mxu0 0.0
    %620 = vmatpush1.msra.mxu0 0.0
    %621 = vmatprep.subr.mxu0 0.0
    %622 = vmatpush1.msra.mxu0 0.0
    %623 = vmatprep.subr.mxu0 0.0
    %624 = vmatpush1.msra.mxu0 0.0
    %625 = vmatprep.subr.mxu0 0.0
    %626 = vmatpush1.msra.mxu0 0.0
    %627 = vmatprep.subr.mxu0 0.0
    %628 = vmatpush1.msra.mxu0 0.0
    %629 = vmatprep.subr.mxu0 0.0
    %630 = vmatpush1.msra.mxu0 0.0
    %631 = vmatprep.subr.mxu0 0.0
    %632 = vmatpush1.msra.mxu0 0.0
    %633 = vmatprep.subr.mxu0 0.0
    %634 = vmatpush1.msra.mxu0 0.0
    %635 = vmatprep.subr.mxu0 0.0
    %636 = vmatpush1.msra.mxu0 0.0
    %637 = vmatprep.subr.mxu0 0.0
    %638 = vmatpush1.msra.mxu0 0.0
    %639 = vmatprep.subr.mxu0 0.0
    %640 = vmatpush1.msra.mxu0 0.0
    %641 = vmatprep.subr.mxu0 0.0
    %642 = vmatpush1.msra.mxu0 0.0
    %643 = vmatprep.subr.mxu0 0.0
    %644 = vmatpush1.msra.mxu0 0.0
    %645 = vmatprep.subr.mxu0 0.0
    %646 = vmatpush1.msra.mxu0 0.0
    %647 = vmatprep.subr.mxu0 0.0
    %648 = vmatpush1.msra.mxu0 0.0
    %649 = vmatprep.subr.mxu0 0.0
    %650 = vmatpush1.msra.mxu0 0.0
    %651 = vmatprep.subr.mxu0 0.0
    %652 = vmatpush1.msra.mxu0 0.0
    %653 = vmatprep.mubr.f32.mxu0 0.0
    %654 = vmatmul.mubr.f32.gmra.mrb[0].mxu0 %v587
    %v655 = vpop.f32.mrb[0].mxu0
    %v656 = vadd.f32 0.0, %v655
    %v657 = vpop.f32.mrb[0].mxu0
    %658 = vdwg.mxu0
    %v659 = vadd.f32 %v586, %v656
    %v660 = vxor.u32 %v659, 2147483648
    %v661 = vmul.f32 %v660, 1.442695
    %v662 = vpow.pop %v661
    %v663 = vadd.f32 %v662, 1.0
    %v664 = vrcp.pop %v663
    %v665 = vmul.f32 1.0, %v664
    %v666 = vtanh.pop %v659
    %v667 = vmul.f32 %v665, %v572
    %669 = vrot.lane.b32.xlu0 %v666, 64
    %v670 = vpop.permute.xlu0 %669
    %v672 = vmul.f32 %v665, %v670
    %674 = vrot.lane.b32.xlu0 %v672, 32
    %v675 = vpop.permute.xlu0 %674
    %v677 = vadd.f32 %v667, %v675
    %v678 = vtanh.pop %v677
    %680 = vrot.lane.b32.xlu0 %v678, 64
    %v681 = vpop.permute.xlu0 %680
    %v683 = vmul.f32 %v665, %v681
    %685 = vrot.lane.b32.xlu0 %v683, 32
    %v686 = vpop.permute.xlu0 %685
    %s688 = scalar_lea.vmem [#allocation3], 24
    %689 = vst.msk [vmem:[%s688] sm:$0xff] %vm267, %v686
    %s690 = scalar_lea.vmem [#allocation2], 32
    %v691 = vld [vmem:[%s690] sm:$0xff]
    %v692 = vsel %vm267, %v686, 0
    %694 = vmatprep.subr.mxu0 0.0
    %695 = vmatpush1.msra.mxu0 %v98
    %696 = vmatprep.subr.mxu0 0.0
    %697 = vmatpush1.msra.mxu0 %v99
    %698 = vmatprep.subr.mxu0 0.0
    %699 = vmatpush1.msra.mxu0 %v100
    %700 = vmatprep.subr.mxu0 0.0
    %701 = vmatpush1.msra.mxu0 %v101
    %702 = vmatprep.subr.mxu0 0.0
    %703 = vmatpush1.msra.mxu0 0.0
    %704 = vmatprep.subr.mxu0 0.0
    %705 = vmatpush1.msra.mxu0 0.0
    %706 = vmatprep.subr.mxu0 0.0
    %707 = vmatpush1.msra.mxu0 0.0
    %708 = vmatprep.subr.mxu0 0.0
    %709 = vmatpush1.msra.mxu0 0.0
    %710 = vmatprep.subr.mxu0 0.0
    %711 = vmatpush1.msra.mxu0 0.0
    %712 = vmatprep.subr.mxu0 0.0
    %713 = vmatpush1.msra.mxu0 0.0
    %714 = vmatprep.subr.mxu0 0.0
    %715 = vmatpush1.msra.mxu0 0.0
    %716 = vmatprep.subr.mxu0 0.0
    %717 = vmatpush1.msra.mxu0 0.0
    %718 = vmatprep.subr.mxu0 0.0
    %719 = vmatpush1.msra.mxu0 0.0
    %720 = vmatprep.subr.mxu0 0.0
    %721 = vmatpush1.msra.mxu0 0.0
    %722 = vmatprep.subr.mxu0 0.0
    %723 = vmatpush1.msra.mxu0 0.0
    %724 = vmatprep.subr.mxu0 0.0
    %725 = vmatpush1.msra.mxu0 0.0
    %726 = vmatprep.subr.mxu0 0.0
    %727 = vmatpush1.msra.mxu0 0.0
    %728 = vmatprep.subr.mxu0 0.0
    %729 = vmatpush1.msra.mxu0 0.0
    %730 = vmatprep.subr.mxu0 0.0
    %731 = vmatpush1.msra.mxu0 0.0
    %732 = vmatprep.subr.mxu0 0.0
    %733 = vmatpush1.msra.mxu0 0.0
    %734 = vmatprep.subr.mxu0 0.0
    %735 = vmatpush1.msra.mxu0 0.0
    %736 = vmatprep.subr.mxu0 0.0
    %737 = vmatpush1.msra.mxu0 0.0
    %738 = vmatprep.subr.mxu0 0.0
    %739 = vmatpush1.msra.mxu0 0.0
    %740 = vmatprep.subr.mxu0 0.0
    %741 = vmatpush1.msra.mxu0 0.0
    %742 = vmatprep.subr.mxu0 0.0
    %743 = vmatpush1.msra.mxu0 0.0
    %744 = vmatprep.subr.mxu0 0.0
    %745 = vmatpush1.msra.mxu0 0.0
    %746 = vmatprep.subr.mxu0 0.0
    %747 = vmatpush1.msra.mxu0 0.0
    %748 = vmatprep.subr.mxu0 0.0
    %749 = vmatpush1.msra.mxu0 0.0
    %750 = vmatprep.subr.mxu0 0.0
    %751 = vmatpush1.msra.mxu0 0.0
    %752 = vmatprep.subr.mxu0 0.0
    %753 = vmatpush1.msra.mxu0 0.0
    %754 = vmatprep.subr.mxu0 0.0
    %755 = vmatpush1.msra.mxu0 0.0
    %756 = vmatprep.subr.mxu0 0.0
    %757 = vmatpush1.msra.mxu0 0.0
    %758 = vmatprep.mubr.f32.mxu0 0.0
    %759 = vmatmul.mubr.f32.gmra.mrb[0].mxu0 %v692
    %v760 = vpop.f32.mrb[0].mxu0
    %v761 = vadd.f32 0.0, %v760
    %v762 = vpop.f32.mrb[0].mxu0
    %763 = vdwg.mxu0
    %v764 = vadd.f32 %v691, %v761
    %v765 = vxor.u32 %v764, 2147483648
    %v766 = vmul.f32 %v765, 1.442695
    %v767 = vpow.pop %v766
    %v768 = vadd.f32 %v767, 1.0
    %v769 = vrcp.pop %v768
    %v770 = vmul.f32 1.0, %v769
    %v771 = vtanh.pop %v764
    %v772 = vmul.f32 %v770, %v677
    %774 = vrot.lane.b32.xlu0 %v771, 64
    %v775 = vpop.permute.xlu0 %774
    %v777 = vmul.f32 %v770, %v775
    %779 = vrot.lane.b32.xlu0 %v777, 32
    %v780 = vpop.permute.xlu0 %779
    %v782 = vadd.f32 %v772, %v780
    %v783 = vtanh.pop %v782
    %785 = vrot.lane.b32.xlu0 %v783, 64
    %v786 = vpop.permute.xlu0 %785
    %v788 = vmul.f32 %v770, %v786
    %790 = vrot.lane.b32.xlu0 %v788, 32
    %v791 = vpop.permute.xlu0 %790
    %s793 = scalar_lea.vmem [#allocation3], 32
    %794 = vst.msk [vmem:[%s793] sm:$0xff] %vm267, %v791
    %s795 = scalar_lea.vmem [#allocation2], 40
    %v796 = vld [vmem:[%s795] sm:$0xff]
    %v797 = vsel %vm267, %v791, 0
    %799 = vmatprep.subr.mxu0 0.0
    %800 = vmatpush1.msra.mxu0 %v98
    %801 = vmatprep.subr.mxu0 0.0
    %802 = vmatpush1.msra.mxu0 %v99
    %803 = vmatprep.subr.mxu0 0.0
    %804 = vmatpush1.msra.mxu0 %v100
    %805 = vmatprep.subr.mxu0 0.0
    %806 = vmatpush1.msra.mxu0 %v101
    %807 = vmatprep.subr.mxu0 0.0
    %808 = vmatpush1.msra.mxu0 0.0
    %809 = vmatprep.subr.mxu0 0.0
    %810 = vmatpush1.msra.mxu0 0.0
    %811 = vmatprep.subr.mxu0 0.0
    %812 = vmatpush1.msra.mxu0 0.0
    %813 = vmatprep.subr.mxu0 0.0
    %814 = vmatpush1.msra.mxu0 0.0
    %815 = vmatprep.subr.mxu0 0.0
    %816 = vmatpush1.msra.mxu0 0.0
    %817 = vmatprep.subr.mxu0 0.0
    %818 = vmatpush1.msra.mxu0 0.0
    %819 = vmatprep.subr.mxu0 0.0
    %820 = vmatpush1.msra.mxu0 0.0
    %821 = vmatprep.subr.mxu0 0.0
    %822 = vmatpush1.msra.mxu0 0.0
    %823 = vmatprep.subr.mxu0 0.0
    %824 = vmatpush1.msra.mxu0 0.0
    %825 = vmatprep.subr.mxu0 0.0
    %826 = vmatpush1.msra.mxu0 0.0
    %827 = vmatprep.subr.mxu0 0.0
    %828 = vmatpush1.msra.mxu0 0.0
    %829 = vmatprep.subr.mxu0 0.0
    %830 = vmatpush1.msra.mxu0 0.0
    %831 = vmatprep.subr.mxu0 0.0
    %832 = vmatpush1.msra.mxu0 0.0
    %833 = vmatprep.subr.mxu0 0.0
    %834 = vmatpush1.msra.mxu0 0.0
    %835 = vmatprep.subr.mxu0 0.0
    %836 = vmatpush1.msra.mxu0 0.0
    %837 = vmatprep.subr.mxu0 0.0
    %838 = vmatpush1.msra.mxu0 0.0
    %839 = vmatprep.subr.mxu0 0.0
    %840 = vmatpush1.msra.mxu0 0.0
    %841 = vmatprep.subr.mxu0 0.0
    %842 = vmatpush1.msra.mxu0 0.0
    %843 = vmatprep.subr.mxu0 0.0
    %844 = vmatpush1.msra.mxu0 0.0
    %845 = vmatprep.subr.mxu0 0.0
    %846 = vmatpush1.msra.mxu0 0.0
    %847 = vmatprep.subr.mxu0 0.0
    %848 = vmatpush1.msra.mxu0 0.0
    %849 = vmatprep.subr.mxu0 0.0
    %850 = vmatpush1.msra.mxu0 0.0
    %851 = vmatprep.subr.mxu0 0.0
    %852 = vmatpush1.msra.mxu0 0.0
    %853 = vmatprep.subr.mxu0 0.0
    %854 = vmatpush1.msra.mxu0 0.0
    %855 = vmatprep.subr.mxu0 0.0
    %856 = vmatpush1.msra.mxu0 0.0
    %857 = vmatprep.subr.mxu0 0.0
    %858 = vmatpush1.msra.mxu0 0.0
    %859 = vmatprep.subr.mxu0 0.0
    %860 = vmatpush1.msra.mxu0 0.0
    %861 = vmatprep.subr.mxu0 0.0
    %862 = vmatpush1.msra.mxu0 0.0
    %863 = vmatprep.mubr.f32.mxu0 0.0
    %864 = vmatmul.mubr.f32.gmra.mrb[0].mxu0 %v797
    %v865 = vpop.f32.mrb[0].mxu0
    %v866 = vadd.f32 0.0, %v865
    %v867 = vpop.f32.mrb[0].mxu0
    %868 = vdwg.mxu0
    %v869 = vadd.f32 %v796, %v866
    %v870 = vxor.u32 %v869, 2147483648
    %v871 = vmul.f32 %v870, 1.442695
    %v872 = vpow.pop %v871
    %v873 = vadd.f32 %v872, 1.0
    %v874 = vrcp.pop %v873
    %v875 = vmul.f32 1.0, %v874
    %v876 = vtanh.pop %v869
    %v877 = vmul.f32 %v875, %v782
    %879 = vrot.lane.b32.xlu0 %v876, 64
    %v880 = vpop.permute.xlu0 %879
    %v882 = vmul.f32 %v875, %v880
    %884 = vrot.lane.b32.xlu0 %v882, 32
    %v885 = vpop.permute.xlu0 %884
    %v887 = vadd.f32 %v877, %v885
    %v888 = vtanh.pop %v887
    %890 = vrot.lane.b32.xlu0 %v888, 64
    %v891 = vpop.permute.xlu0 %890
    %v893 = vmul.f32 %v875, %v891
    %895 = vrot.lane.b32.xlu0 %v893, 32
    %v896 = vpop.permute.xlu0 %895
    %s898 = scalar_lea.vmem [#allocation3], 40
    %899 = vst.msk [vmem:[%s898] sm:$0xff] %vm267, %v896
    %s900 = scalar_lea.vmem [#allocation2], 48
    %v901 = vld [vmem:[%s900] sm:$0xff]
    %v902 = vsel %vm267, %v896, 0
    %904 = vmatprep.subr.mxu0 0.0
    %905 = vmatpush1.msra.mxu0 %v98
    %906 = vmatprep.subr.mxu0 0.0
    %907 = vmatpush1.msra.mxu0 %v99
    %908 = vmatprep.subr.mxu0 0.0
    %909 = vmatpush1.msra.mxu0 %v100
    %910 = vmatprep.subr.mxu0 0.0
    %911 = vmatpush1.msra.mxu0 %v101
    %912 = vmatprep.subr.mxu0 0.0
    %913 = vmatpush1.msra.mxu0 0.0
    %914 = vmatprep.subr.mxu0 0.0
    %915 = vmatpush1.msra.mxu0 0.0
    %916 = vmatprep.subr.mxu0 0.0
    %917 = vmatpush1.msra.mxu0 0.0
    %918 = vmatprep.subr.mxu0 0.0
    %919 = vmatpush1.msra.mxu0 0.0
    %920 = vmatprep.subr.mxu0 0.0
    %921 = vmatpush1.msra.mxu0 0.0
    %922 = vmatprep.subr.mxu0 0.0
    %923 = vmatpush1.msra.mxu0 0.0
    %924 = vmatprep.subr.mxu0 0.0
    %925 = vmatpush1.msra.mxu0 0.0
    %926 = vmatprep.subr.mxu0 0.0
    %927 = vmatpush1.msra.mxu0 0.0
    %928 = vmatprep.subr.mxu0 0.0
    %929 = vmatpush1.msra.mxu0 0.0
    %930 = vmatprep.subr.mxu0 0.0
    %931 = vmatpush1.msra.mxu0 0.0
    %932 = vmatprep.subr.mxu0 0.0
    %933 = vmatpush1.msra.mxu0 0.0
    %934 = vmatprep.subr.mxu0 0.0
    %935 = vmatpush1.msra.mxu0 0.0
    %936 = vmatprep.subr.mxu0 0.0
    %937 = vmatpush1.msra.mxu0 0.0
    %938 = vmatprep.subr.mxu0 0.0
    %939 = vmatpush1.msra.mxu0 0.0
    %940 = vmatprep.subr.mxu0 0.0
    %941 = vmatpush1.msra.mxu0 0.0
    %942 = vmatprep.subr.mxu0 0.0
    %943 = vmatpush1.msra.mxu0 0.0
    %944 = vmatprep.subr.mxu0 0.0
    %945 = vmatpush1.msra.mxu0 0.0
    %946 = vmatprep.subr.mxu0 0.0
    %947 = vmatpush1.msra.mxu0 0.0
    %948 = vmatprep.subr.mxu0 0.0
    %949 = vmatpush1.msra.mxu0 0.0
    %950 = vmatprep.subr.mxu0 0.0
    %951 = vmatpush1.msra.mxu0 0.0
    %952 = vmatprep.subr.mxu0 0.0
    %953 = vmatpush1.msra.mxu0 0.0
    %954 = vmatprep.subr.mxu0 0.0
    %955 = vmatpush1.msra.mxu0 0.0
    %956 = vmatprep.subr.mxu0 0.0
    %957 = vmatpush1.msra.mxu0 0.0
    %958 = vmatprep.subr.mxu0 0.0
    %959 = vmatpush1.msra.mxu0 0.0
    %960 = vmatprep.subr.mxu0 0.0
    %961 = vmatpush1.msra.mxu0 0.0
    %962 = vmatprep.subr.mxu0 0.0
    %963 = vmatpush1.msra.mxu0 0.0
    %964 = vmatprep.subr.mxu0 0.0
    %965 = vmatpush1.msra.mxu0 0.0
    %966 = vmatprep.subr.mxu0 0.0
    %967 = vmatpush1.msra.mxu0 0.0
    %968 = vmatprep.mubr.f32.mxu0 0.0
    %969 = vmatmul.mubr.f32.gmra.mrb[0].mxu0 %v902
    %v970 = vpop.f32.mrb[0].mxu0
    %v971 = vadd.f32 0.0, %v970
    %v972 = vpop.f32.mrb[0].mxu0
    %973 = vdwg.mxu0
    %v974 = vadd.f32 %v901, %v971
    %v975 = vxor.u32 %v974, 2147483648
    %v976 = vmul.f32 %v975, 1.442695
    %v977 = vpow.pop %v976
    %v978 = vadd.f32 %v977, 1.0
    %v979 = vrcp.pop %v978
    %v980 = vmul.f32 1.0, %v979
    %v981 = vtanh.pop %v974
    %v982 = vmul.f32 %v980, %v887
    %984 = vrot.lane.b32.xlu0 %v981, 64
    %v985 = vpop.permute.xlu0 %984
    %v987 = vmul.f32 %v980, %v985
    %989 = vrot.lane.b32.xlu0 %v987, 32
    %v990 = vpop.permute.xlu0 %989
    %v992 = vadd.f32 %v982, %v990
    %v993 = vtanh.pop %v992
    %995 = vrot.lane.b32.xlu0 %v993, 64
    %v996 = vpop.permute.xlu0 %995
    %v998 = vmul.f32 %v980, %v996
    %1000 = vrot.lane.b32.xlu0 %v998, 32
    %v1001 = vpop.permute.xlu0 %1000
    %s1003 = scalar_lea.vmem [#allocation3], 48
    %1004 = vst.msk [vmem:[%s1003] sm:$0xff] %vm267, %v1001
    %s1005 = scalar_lea.vmem [#allocation2], 56
    %v1006 = vld [vmem:[%s1005] sm:$0xff]
    %v1007 = vsel %vm267, %v1001, 0
    %1009 = vmatprep.subr.mxu0 0.0
    %1010 = vmatpush1.msra.mxu0 %v98
    %1011 = vmatprep.subr.mxu0 0.0
    %1012 = vmatpush1.msra.mxu0 %v99
    %1013 = vmatprep.subr.mxu0 0.0
    %1014 = vmatpush1.msra.mxu0 %v100
    %1015 = vmatprep.subr.mxu0 0.0
    %1016 = vmatpush1.msra.mxu0 %v101
    %1017 = vmatprep.subr.mxu0 0.0
    %1018 = vmatpush1.msra.mxu0 0.0
    %1019 = vmatprep.subr.mxu0 0.0
    %1020 = vmatpush1.msra.mxu0 0.0
    %1021 = vmatprep.subr.mxu0 0.0
    %1022 = vmatpush1.msra.mxu0 0.0
    %1023 = vmatprep.subr.mxu0 0.0
    %1024 = vmatpush1.msra.mxu0 0.0
    %1025 = vmatprep.subr.mxu0 0.0
    %1026 = vmatpush1.msra.mxu0 0.0
    %1027 = vmatprep.subr.mxu0 0.0
    %1028 = vmatpush1.msra.mxu0 0.0
    %1029 = vmatprep.subr.mxu0 0.0
    %1030 = vmatpush1.msra.mxu0 0.0
    %1031 = vmatprep.subr.mxu0 0.0
    %1032 = vmatpush1.msra.mxu0 0.0
    %1033 = vmatprep.subr.mxu0 0.0
    %1034 = vmatpush1.msra.mxu0 0.0
    %1035 = vmatprep.subr.mxu0 0.0
    %1036 = vmatpush1.msra.mxu0 0.0
    %1037 = vmatprep.subr.mxu0 0.0
    %1038 = vmatpush1.msra.mxu0 0.0
    %1039 = vmatprep.subr.mxu0 0.0
    %1040 = vmatpush1.msra.mxu0 0.0
    %1041 = vmatprep.subr.mxu0 0.0
    %1042 = vmatpush1.msra.mxu0 0.0
    %1043 = vmatprep.subr.mxu0 0.0
    %1044 = vmatpush1.msra.mxu0 0.0
    %1045 = vmatprep.subr.mxu0 0.0
    %1046 = vmatpush1.msra.mxu0 0.0
    %1047 = vmatprep.subr.mxu0 0.0
    %1048 = vmatpush1.msra.mxu0 0.0
    %1049 = vmatprep.subr.mxu0 0.0
    %1050 = vmatpush1.msra.mxu0 0.0
    %1051 = vmatprep.subr.mxu0 0.0
    %1052 = vmatpush1.msra.mxu0 0.0
    %1053 = vmatprep.subr.mxu0 0.0
    %1054 = vmatpush1.msra.mxu0 0.0
    %1055 = vmatprep.subr.mxu0 0.0
    %1056 = vmatpush1.msra.mxu0 0.0
    %1057 = vmatprep.subr.mxu0 0.0
    %1058 = vmatpush1.msra.mxu0 0.0
    %1059 = vmatprep.subr.mxu0 0.0
    %1060 = vmatpush1.msra.mxu0 0.0
    %1061 = vmatprep.subr.mxu0 0.0
    %1062 = vmatpush1.msra.mxu0 0.0
    %1063 = vmatprep.subr.mxu0 0.0
    %1064 = vmatpush1.msra.mxu0 0.0
    %1065 = vmatprep.subr.mxu0 0.0
    %1066 = vmatpush1.msra.mxu0 0.0
    %1067 = vmatprep.subr.mxu0 0.0
    %1068 = vmatpush1.msra.mxu0 0.0
    %1069 = vmatprep.subr.mxu0 0.0
    %1070 = vmatpush1.msra.mxu0 0.0
    %1071 = vmatprep.subr.mxu0 0.0
    %1072 = vmatpush1.msra.mxu0 0.0
    %1073 = vmatprep.mubr.f32.mxu0 0.0
    %1074 = vmatmul.mubr.f32.gmra.mrb[0].mxu0 %v1007
    %v1075 = vpop.f32.mrb[0].mxu0
    %v1076 = vadd.f32 0.0, %v1075
    %v1077 = vpop.f32.mrb[0].mxu0
    %1078 = vdwg.mxu0
    %v1079 = vadd.f32 %v1006, %v1076
    %v1080 = vxor.u32 %v1079, 2147483648
    %v1081 = vmul.f32 %v1080, 1.442695
    %v1082 = vpow.pop %v1081
    %v1083 = vadd.f32 %v1082, 1.0
    %v1084 = vrcp.pop %v1083
    %v1085 = vmul.f32 1.0, %v1084
    %v1086 = vtanh.pop %v1079
    %v1087 = vmul.f32 %v1085, %v992
    %1089 = vrot.lane.b32.xlu0 %v1086, 64
    %v1090 = vpop.permute.xlu0 %1089
    %v1092 = vmul.f32 %v1085, %v1090
    %1094 = vrot.lane.b32.xlu0 %v1092, 32
    %v1095 = vpop.permute.xlu0 %1094
    %v1097 = vadd.f32 %v1087, %v1095
    %v1098 = vtanh.pop %v1097
    %1100 = vrot.lane.b32.xlu0 %v1098, 64
    %v1101 = vpop.permute.xlu0 %1100
    %v1103 = vmul.f32 %v1085, %v1101
    %1105 = vrot.lane.b32.xlu0 %v1103, 32
    %v1106 = vpop.permute.xlu0 %1105
    %s1108 = scalar_lea.vmem [#allocation3], 56
    %1109 = vst.msk [vmem:[%s1108] sm:$0xff] %vm267, %v1106
    %1110 = vst.msk [vmem:[#allocation4] sm:$0xff] %vm267, %v1106
    %1112 = vrot.lane.b32.xlu0 %v1097, 96
    %v1113 = vpop.permute.xlu0 %1112
    %1115 = vst.msk [vmem:[#allocation5] sm:$0xff] %vm267, %v1113
    %v1116 = vld [vmem:[#allocation3] sm:$0xff]
    %v1117 = vld [vmem:[#allocation3 + $0x8] sm:$0xff]
    %v1118 = vld [vmem:[#allocation3 + $0x10] sm:$0xff]
    %v1119 = vld [vmem:[#allocation3 + $0x18] sm:$0xff]
    %v1120 = vld [vmem:[#allocation3 + $0x20] sm:$0xff]
    %v1121 = vld [vmem:[#allocation3 + $0x28] sm:$0xff]
    %v1122 = vld [vmem:[#allocation3 + $0x30] sm:$0xff]
    %v1123 = vld [vmem:[#allocation3 + $0x38] sm:$0xff]
    %v1125 = vlaneseq
    %v1126 = vshrl.u32 %v1125, 7
    %v1127 = vsub.s32 0, %v1126
    %v1128 = vrot.slane %v111, %v1127
    %v1131 = vsel %vm267, %v1116, 0
    %v1134 = vsel %vm267, %v1117, 0
    %v1137 = vsel %vm267, %v1118, 0
    %v1140 = vsel %vm267, %v1119, 0
    %v1143 = vsel %vm267, %v1120, 0
    %v1146 = vsel %vm267, %v1121, 0
    %v1149 = vsel %vm267, %v1122, 0
    %v1152 = vsel %vm267, %v1123, 0
    %1154 = vmatprep.subr.mxu0 0.0
    %1155 = vmatpush1.msra.mxu0 %v103
    %1156 = vmatprep.subr.mxu0 0.0
    %1157 = vmatpush1.msra.mxu0 %v104
    %1158 = vmatprep.subr.mxu0 0.0
    %1159 = vmatpush1.msra.mxu0 %v105
    %1160 = vmatprep.subr.mxu0 0.0
    %1161 = vmatpush1.msra.mxu0 %v106
    %1162 = vmatprep.subr.mxu0 0.0
    %1163 = vmatpush1.msra.mxu0 0.0
    %1164 = vmatprep.subr.mxu0 0.0
    %1165 = vmatpush1.msra.mxu0 0.0
    %1166 = vmatprep.subr.mxu0 0.0
    %1167 = vmatpush1.msra.mxu0 0.0
    %1168 = vmatprep.subr.mxu0 0.0
    %1169 = vmatpush1.msra.mxu0 0.0
    %1170 = vmatprep.subr.mxu0 0.0
    %1171 = vmatpush1.msra.mxu0 0.0
    %1172 = vmatprep.subr.mxu0 0.0
    %1173 = vmatpush1.msra.mxu0 0.0
    %1174 = vmatprep.subr.mxu0 0.0
    %1175 = vmatpush1.msra.mxu0 0.0
    %1176 = vmatprep.subr.mxu0 0.0
    %1177 = vmatpush1.msra.mxu0 0.0
    %1178 = vmatprep.subr.mxu0 0.0
    %1179 = vmatpush1.msra.mxu0 0.0
    %1180 = vmatprep.subr.mxu0 0.0
    %1181 = vmatpush1.msra.mxu0 0.0
    %1182 = vmatprep.subr.mxu0 0.0
    %1183 = vmatpush1.msra.mxu0 0.0
    %1184 = vmatprep.subr.mxu0 0.0
    %1185 = vmatpush1.msra.mxu0 0.0
    %1186 = vmatprep.subr.mxu0 0.0
    %1187 = vmatpush1.msra.mxu0 0.0
    %1188 = vmatprep.subr.mxu0 0.0
    %1189 = vmatpush1.msra.mxu0 0.0
    %1190 = vmatprep.subr.mxu0 0.0
    %1191 = vmatpush1.msra.mxu0 0.0
    %1192 = vmatprep.subr.mxu0 0.0
    %1193 = vmatpush1.msra.mxu0 0.0
    %1194 = vmatprep.subr.mxu0 0.0
    %1195 = vmatpush1.msra.mxu0 0.0
    %1196 = vmatprep.subr.mxu0 0.0
    %1197 = vmatpush1.msra.mxu0 0.0
    %1198 = vmatprep.subr.mxu0 0.0
    %1199 = vmatpush1.msra.mxu0 0.0
    %1200 = vmatprep.subr.mxu0 0.0
    %1201 = vmatpush1.msra.mxu0 0.0
    %1202 = vmatprep.subr.mxu0 0.0
    %1203 = vmatpush1.msra.mxu0 0.0
    %1204 = vmatprep.subr.mxu0 0.0
    %1205 = vmatpush1.msra.mxu0 0.0
    %1206 = vmatprep.subr.mxu0 0.0
    %1207 = vmatpush1.msra.mxu0 0.0
    %1208 = vmatprep.subr.mxu0 0.0
    %1209 = vmatpush1.msra.mxu0 0.0
    %1210 = vmatprep.subr.mxu0 0.0
    %1211 = vmatpush1.msra.mxu0 0.0
    %1212 = vmatprep.subr.mxu0 0.0
    %1213 = vmatpush1.msra.mxu0 0.0
    %1214 = vmatprep.subr.mxu0 0.0
    %1215 = vmatpush1.msra.mxu0 0.0
    %1216 = vmatprep.subr.mxu0 0.0
    %1217 = vmatpush1.msra.mxu0 0.0
    %1218 = vmatprep.mubr.f32.mxu0 0.0
    %1219 = vmatmul.mubr.f32.gmra.mrb[0].mxu0 %v1131
    %v1220 = vpop.f32.mrb[0].mxu0
    %v1221 = vadd.f32 %v1128, %v1220
    %v1222 = vpop.f32.mrb[0].mxu0
    %1223 = vmatprep.mubr.f32.mxu0 0.0
    %1224 = vmatmul.mubr.f32.gmra.mrb[0].mxu0 %v1134
    %v1225 = vpop.f32.mrb[0].mxu0
    %v1226 = vadd.f32 %v1128, %v1225
    %v1227 = vpop.f32.mrb[0].mxu0
    %1228 = vmatprep.mubr.f32.mxu0 0.0
    %1229 = vmatmul.mubr.f32.gmra.mrb[0].mxu0 %v1137
    %v1230 = vpop.f32.mrb[0].mxu0
    %v1231 = vadd.f32 %v1128, %v1230
    %v1232 = vpop.f32.mrb[0].mxu0
    %1233 = vmatprep.mubr.f32.mxu0 0.0
    %1234 = vmatmul.mubr.f32.gmra.mrb[0].mxu0 %v1140
    %v1235 = vpop.f32.mrb[0].mxu0
    %v1236 = vadd.f32 %v1128, %v1235
    %v1237 = vpop.f32.mrb[0].mxu0
    %1238 = vmatprep.mubr.f32.mxu0 0.0
    %1239 = vmatmul.mubr.f32.gmra.mrb[0].mxu0 %v1143
    %v1240 = vpop.f32.mrb[0].mxu0
    %v1241 = vadd.f32 %v1128, %v1240
    %v1242 = vpop.f32.mrb[0].mxu0
    %1243 = vmatprep.mubr.f32.mxu0 0.0
    %1244 = vmatmul.mubr.f32.gmra.mrb[0].mxu0 %v1146
    %v1245 = vpop.f32.mrb[0].mxu0
    %v1246 = vadd.f32 %v1128, %v1245
    %v1247 = vpop.f32.mrb[0].mxu0
    %1248 = vmatprep.mubr.f32.mxu0 0.0
    %1249 = vmatmul.mubr.f32.gmra.mrb[0].mxu0 %v1149
    %v1250 = vpop.f32.mrb[0].mxu0
    %v1251 = vadd.f32 %v1128, %v1250
    %v1252 = vpop.f32.mrb[0].mxu0
    %1253 = vmatprep.mubr.f32.mxu0 0.0
    %1254 = vmatmul.mubr.f32.gmra.mrb[0].mxu0 %v1152
    %v1255 = vpop.f32.mrb[0].mxu0
    %v1256 = vadd.f32 %v1128, %v1255
    %v1257 = vpop.f32.mrb[0].mxu0
    %1258 = vdwg.mxu0
    %1259 = vst [vmem:[#allocation2] sm:$0xff] %v1221
    %1260 = vst [vmem:[#allocation2 + $0x8] sm:$0xff] %v1226
    %1261 = vst [vmem:[#allocation2 + $0x10] sm:$0xff] %v1231
    %1262 = vst [vmem:[#allocation2 + $0x18] sm:$0xff] %v1236
    %1263 = vst [vmem:[#allocation2 + $0x20] sm:$0xff] %v1241
    %1264 = vst [vmem:[#allocation2 + $0x28] sm:$0xff] %v1246
    %1265 = vst [vmem:[#allocation2 + $0x30] sm:$0xff] %v1251
    %1266 = vst [vmem:[#allocation2 + $0x38] sm:$0xff] %v1256
    %v1267 = vld [vmem:[#allocation6] sm:$0xff]
    %v1268 = vld [vmem:[#allocation7] sm:$0xff]
    %v1269 = vld [vmem:[#allocation2] sm:$0xff]
    %v1271 = vsel %vm267, %v1267, 0
    %1273 = vmatprep.subr.mxu0 0.0
    %1274 = vmatpush1.msra.mxu0 %v107
    %1275 = vmatprep.subr.mxu0 0.0
    %1276 = vmatpush1.msra.mxu0 %v108
    %1277 = vmatprep.subr.mxu0 0.0
    %1278 = vmatpush1.msra.mxu0 %v109
    %1279 = vmatprep.subr.mxu0 0.0
    %1280 = vmatpush1.msra.mxu0 %v110
    %1281 = vmatprep.subr.mxu0 0.0
    %1282 = vmatpush1.msra.mxu0 0.0
    %1283 = vmatprep.subr.mxu0 0.0
    %1284 = vmatpush1.msra.mxu0 0.0
    %1285 = vmatprep.subr.mxu0 0.0
    %1286 = vmatpush1.msra.mxu0 0.0
    %1287 = vmatprep.subr.mxu0 0.0
    %1288 = vmatpush1.msra.mxu0 0.0
    %1289 = vmatprep.subr.mxu0 0.0
    %1290 = vmatpush1.msra.mxu0 0.0
    %1291 = vmatprep.subr.mxu0 0.0
    %1292 = vmatpush1.msra.mxu0 0.0
    %1293 = vmatprep.subr.mxu0 0.0
    %1294 = vmatpush1.msra.mxu0 0.0
    %1295 = vmatprep.subr.mxu0 0.0
    %1296 = vmatpush1.msra.mxu0 0.0
    %1297 = vmatprep.subr.mxu0 0.0
    %1298 = vmatpush1.msra.mxu0 0.0
    %1299 = vmatprep.subr.mxu0 0.0
    %1300 = vmatpush1.msra.mxu0 0.0
    %1301 = vmatprep.subr.mxu0 0.0
    %1302 = vmatpush1.msra.mxu0 0.0
    %1303 = vmatprep.subr.mxu0 0.0
    %1304 = vmatpush1.msra.mxu0 0.0
    %1305 = vmatprep.subr.mxu0 0.0
    %1306 = vmatpush1.msra.mxu0 0.0
    %1307 = vmatprep.subr.mxu0 0.0
    %1308 = vmatpush1.msra.mxu0 0.0
    %1309 = vmatprep.subr.mxu0 0.0
    %1310 = vmatpush1.msra.mxu0 0.0
    %1311 = vmatprep.subr.mxu0 0.0
    %1312 = vmatpush1.msra.mxu0 0.0
    %1313 = vmatprep.subr.mxu0 0.0
    %1314 = vmatpush1.msra.mxu0 0.0
    %1315 = vmatprep.subr.mxu0 0.0
    %1316 = vmatpush1.msra.mxu0 0.0
    %1317 = vmatprep.subr.mxu0 0.0
    %1318 = vmatpush1.msra.mxu0 0.0
    %1319 = vmatprep.subr.mxu0 0.0
    %1320 = vmatpush1.msra.mxu0 0.0
    %1321 = vmatprep.subr.mxu0 0.0
    %1322 = vmatpush1.msra.mxu0 0.0
    %1323 = vmatprep.subr.mxu0 0.0
    %1324 = vmatpush1.msra.mxu0 0.0
    %1325 = vmatprep.subr.mxu0 0.0
    %1326 = vmatpush1.msra.mxu0 0.0
    %1327 = vmatprep.subr.mxu0 0.0
    %1328 = vmatpush1.msra.mxu0 0.0
    %1329 = vmatprep.subr.mxu0 0.0
    %1330 = vmatpush1.msra.mxu0 0.0
    %1331 = vmatprep.subr.mxu0 0.0
    %1332 = vmatpush1.msra.mxu0 0.0
    %1333 = vmatprep.subr.mxu0 0.0
    %1334 = vmatpush1.msra.mxu0 0.0
    %1335 = vmatprep.subr.mxu0 0.0
    %1336 = vmatpush1.msra.mxu0 0.0
    %1337 = vmatprep.mubr.f32.mxu0 0.0
    %1338 = vmatmul.mubr.f32.gmra.mrb[0].mxu0 %v1271
    %v1339 = vpop.f32.mrb[0].mxu0
    %v1340 = vadd.f32 0.0, %v1339
    %v1341 = vpop.f32.mrb[0].mxu0
    %1342 = vdwg.mxu0
    %v1343 = vadd.f32 %v1269, %v1340
    %v1344 = vxor.u32 %v1343, 2147483648
    %v1345 = vmul.f32 %v1344, 1.442695
    %v1346 = vpow.pop %v1345
    %v1347 = vadd.f32 %v1346, 1.0
    %v1348 = vrcp.pop %v1347
    %v1349 = vmul.f32 1.0, %v1348
    %v1350 = vtanh.pop %v1343
    %1352 = vrot.lane.b32.xlu0 %v1268, 32
    %v1353 = vpop.permute.xlu0 %1352
    %v1355 = vmul.f32 %v1349, %v1353
    %1357 = vrot.lane.b32.xlu0 %v1350, 64
    %v1358 = vpop.permute.xlu0 %1357
    %v1360 = vmul.f32 %v1349, %v1358
    %1362 = vrot.lane.b32.xlu0 %v1360, 32
    %v1363 = vpop.permute.xlu0 %1362
    %v1365 = vadd.f32 %v1355, %v1363
    %v1366 = vtanh.pop %v1365
    %1368 = vrot.lane.b32.xlu0 %v1366, 64
    %v1369 = vpop.permute.xlu0 %1368
    %v1371 = vmul.f32 %v1349, %v1369
    %v1372 = vld [vmem:[%s375] sm:$0xff]
    %1374 = vrot.lane.b32.xlu0 %v1371, 32
    %v1375 = vpop.permute.xlu0 %1374
    %v1376 = vsel %vm267, %v1375, 0
    %1378 = vmatprep.subr.mxu0 0.0
    %1379 = vmatpush1.msra.mxu0 %v107
    %1380 = vmatprep.subr.mxu0 0.0
    %1381 = vmatpush1.msra.mxu0 %v108
    %1382 = vmatprep.subr.mxu0 0.0
    %1383 = vmatpush1.msra.mxu0 %v109
    %1384 = vmatprep.subr.mxu0 0.0
    %1385 = vmatpush1.msra.mxu0 %v110
    %1386 = vmatprep.subr.mxu0 0.0
    %1387 = vmatpush1.msra.mxu0 0.0
    %1388 = vmatprep.subr.mxu0 0.0
    %1389 = vmatpush1.msra.mxu0 0.0
    %1390 = vmatprep.subr.mxu0 0.0
    %1391 = vmatpush1.msra.mxu0 0.0
    %1392 = vmatprep.subr.mxu0 0.0
    %1393 = vmatpush1.msra.mxu0 0.0
    %1394 = vmatprep.subr.mxu0 0.0
    %1395 = vmatpush1.msra.mxu0 0.0
    %1396 = vmatprep.subr.mxu0 0.0
    %1397 = vmatpush1.msra.mxu0 0.0
    %1398 = vmatprep.subr.mxu0 0.0
    %1399 = vmatpush1.msra.mxu0 0.0
    %1400 = vmatprep.subr.mxu0 0.0
    %1401 = vmatpush1.msra.mxu0 0.0
    %1402 = vmatprep.subr.mxu0 0.0
    %1403 = vmatpush1.msra.mxu0 0.0
    %1404 = vmatprep.subr.mxu0 0.0
    %1405 = vmatpush1.msra.mxu0 0.0
    %1406 = vmatprep.subr.mxu0 0.0
    %1407 = vmatpush1.msra.mxu0 0.0
    %1408 = vmatprep.subr.mxu0 0.0
    %1409 = vmatpush1.msra.mxu0 0.0
    %1410 = vmatprep.subr.mxu0 0.0
    %1411 = vmatpush1.msra.mxu0 0.0
    %1412 = vmatprep.subr.mxu0 0.0
    %1413 = vmatpush1.msra.mxu0 0.0
    %1414 = vmatprep.subr.mxu0 0.0
    %1415 = vmatpush1.msra.mxu0 0.0
    %1416 = vmatprep.subr.mxu0 0.0
    %1417 = vmatpush1.msra.mxu0 0.0
    %1418 = vmatprep.subr.mxu0 0.0
    %1419 = vmatpush1.msra.mxu0 0.0
    %1420 = vmatprep.subr.mxu0 0.0
    %1421 = vmatpush1.msra.mxu0 0.0
    %1422 = vmatprep.subr.mxu0 0.0
    %1423 = vmatpush1.msra.mxu0 0.0
    %1424 = vmatprep.subr.mxu0 0.0
    %1425 = vmatpush1.msra.mxu0 0.0
    %1426 = vmatprep.subr.mxu0 0.0
    %1427 = vmatpush1.msra.mxu0 0.0
    %1428 = vmatprep.subr.mxu0 0.0
    %1429 = vmatpush1.msra.mxu0 0.0
    %1430 = vmatprep.subr.mxu0 0.0
    %1431 = vmatpush1.msra.mxu0 0.0
    %1432 = vmatprep.subr.mxu0 0.0
    %1433 = vmatpush1.msra.mxu0 0.0
    %1434 = vmatprep.subr.mxu0 0.0
    %1435 = vmatpush1.msra.mxu0 0.0
    %1436 = vmatprep.subr.mxu0 0.0
    %1437 = vmatpush1.msra.mxu0 0.0
    %1438 = vmatprep.subr.mxu0 0.0
    %1439 = vmatpush1.msra.mxu0 0.0
    %1440 = vmatprep.subr.mxu0 0.0
    %1441 = vmatpush1.msra.mxu0 0.0
    %1442 = vmatprep.mubr.f32.mxu0 0.0
    %1443 = vmatmul.mubr.f32.gmra.mrb[0].mxu0 %v1376
    %v1444 = vpop.f32.mrb[0].mxu0
    %v1445 = vadd.f32 0.0, %v1444
    %v1446 = vpop.f32.mrb[0].mxu0
    %1447 = vdwg.mxu0
    %v1448 = vadd.f32 %v1372, %v1445
    %v1449 = vxor.u32 %v1448, 2147483648
    %v1450 = vmul.f32 %v1449, 1.442695
    %v1451 = vpow.pop %v1450
    %v1452 = vadd.f32 %v1451, 1.0
    %v1453 = vrcp.pop %v1452
    %v1454 = vmul.f32 1.0, %v1453
    %v1455 = vtanh.pop %v1448
    %v1456 = vmul.f32 %v1454, %v1365
    %1458 = vrot.lane.b32.xlu0 %v1455, 64
    %v1459 = vpop.permute.xlu0 %1458
    %v1461 = vmul.f32 %v1454, %v1459
    %1463 = vrot.lane.b32.xlu0 %v1461, 32
    %v1464 = vpop.permute.xlu0 %1463
    %v1466 = vadd.f32 %v1456, %v1464
    %v1467 = vtanh.pop %v1466
    %1469 = vrot.lane.b32.xlu0 %v1467, 64
    %v1470 = vpop.permute.xlu0 %1469
    %v1472 = vmul.f32 %v1454, %v1470
    %v1473 = vld [vmem:[%s480] sm:$0xff]
    %1475 = vrot.lane.b32.xlu0 %v1472, 32
    %v1476 = vpop.permute.xlu0 %1475
    %v1477 = vsel %vm267, %v1476, 0
    %1479 = vmatprep.subr.mxu0 0.0
    %1480 = vmatpush1.msra.mxu0 %v107
    %1481 = vmatprep.subr.mxu0 0.0
    %1482 = vmatpush1.msra.mxu0 %v108
    %1483 = vmatprep.subr.mxu0 0.0
    %1484 = vmatpush1.msra.mxu0 %v109
    %1485 = vmatprep.subr.mxu0 0.0
    %1486 = vmatpush1.msra.mxu0 %v110
    %1487 = vmatprep.subr.mxu0 0.0
    %1488 = vmatpush1.msra.mxu0 0.0
    %1489 = vmatprep.subr.mxu0 0.0
    %1490 = vmatpush1.msra.mxu0 0.0
    %1491 = vmatprep.subr.mxu0 0.0
    %1492 = vmatpush1.msra.mxu0 0.0
    %1493 = vmatprep.subr.mxu0 0.0
    %1494 = vmatpush1.msra.mxu0 0.0
    %1495 = vmatprep.subr.mxu0 0.0
    %1496 = vmatpush1.msra.mxu0 0.0
    %1497 = vmatprep.subr.mxu0 0.0
    %1498 = vmatpush1.msra.mxu0 0.0
    %1499 = vmatprep.subr.mxu0 0.0
    %1500 = vmatpush1.msra.mxu0 0.0
    %1501 = vmatprep.subr.mxu0 0.0
    %1502 = vmatpush1.msra.mxu0 0.0
    %1503 = vmatprep.subr.mxu0 0.0
    %1504 = vmatpush1.msra.mxu0 0.0
    %1505 = vmatprep.subr.mxu0 0.0
    %1506 = vmatpush1.msra.mxu0 0.0
    %1507 = vmatprep.subr.mxu0 0.0
    %1508 = vmatpush1.msra.mxu0 0.0
    %1509 = vmatprep.subr.mxu0 0.0
    %1510 = vmatpush1.msra.mxu0 0.0
    %1511 = vmatprep.subr.mxu0 0.0
    %1512 = vmatpush1.msra.mxu0 0.0
    %1513 = vmatprep.subr.mxu0 0.0
    %1514 = vmatpush1.msra.mxu0 0.0
    %1515 = vmatprep.subr.mxu0 0.0
    %1516 = vmatpush1.msra.mxu0 0.0
    %1517 = vmatprep.subr.mxu0 0.0
    %1518 = vmatpush1.msra.mxu0 0.0
    %1519 = vmatprep.subr.mxu0 0.0
    %1520 = vmatpush1.msra.mxu0 0.0
    %1521 = vmatprep.subr.mxu0 0.0
    %1522 = vmatpush1.msra.mxu0 0.0
    %1523 = vmatprep.subr.mxu0 0.0
    %1524 = vmatpush1.msra.mxu0 0.0
    %1525 = vmatprep.subr.mxu0 0.0
    %1526 = vmatpush1.msra.mxu0 0.0
    %1527 = vmatprep.subr.mxu0 0.0
    %1528 = vmatpush1.msra.mxu0 0.0
    %1529 = vmatprep.subr.mxu0 0.0
    %1530 = vmatpush1.msra.mxu0 0.0
    %1531 = vmatprep.subr.mxu0 0.0
    %1532 = vmatpush1.msra.mxu0 0.0
    %1533 = vmatprep.subr.mxu0 0.0
    %1534 = vmatpush1.msra.mxu0 0.0
    %1535 = vmatprep.subr.mxu0 0.0
    %1536 = vmatpush1.msra.mxu0 0.0
    %1537 = vmatprep.subr.mxu0 0.0
    %1538 = vmatpush1.msra.mxu0 0.0
    %1539 = vmatprep.subr.mxu0 0.0
    %1540 = vmatpush1.msra.mxu0 0.0
    %1541 = vmatprep.subr.mxu0 0.0
    %1542 = vmatpush1.msra.mxu0 0.0
    %1543 = vmatprep.mubr.f32.mxu0 0.0
    %1544 = vmatmul.mubr.f32.gmra.mrb[0].mxu0 %v1477
    %v1545 = vpop.f32.mrb[0].mxu0
    %v1546 = vadd.f32 0.0, %v1545
    %v1547 = vpop.f32.mrb[0].mxu0
    %1548 = vdwg.mxu0
    %v1549 = vadd.f32 %v1473, %v1546
    %v1550 = vxor.u32 %v1549, 2147483648
    %v1551 = vmul.f32 %v1550, 1.442695
    %v1552 = vpow.pop %v1551
    %v1553 = vadd.f32 %v1552, 1.0
    %v1554 = vrcp.pop %v1553
    %v1555 = vmul.f32 1.0, %v1554
    %v1556 = vtanh.pop %v1549
    %v1557 = vmul.f32 %v1555, %v1466
    %1559 = vrot.lane.b32.xlu0 %v1556, 64
    %v1560 = vpop.permute.xlu0 %1559
    %v1562 = vmul.f32 %v1555, %v1560
    %1564 = vrot.lane.b32.xlu0 %v1562, 32
    %v1565 = vpop.permute.xlu0 %1564
    %v1567 = vadd.f32 %v1557, %v1565
    %v1568 = vtanh.pop %v1567
    %1570 = vrot.lane.b32.xlu0 %v1568, 64
    %v1571 = vpop.permute.xlu0 %1570
    %v1573 = vmul.f32 %v1555, %v1571
    %v1574 = vld [vmem:[%s585] sm:$0xff]
    %1576 = vrot.lane.b32.xlu0 %v1573, 32
    %v1577 = vpop.permute.xlu0 %1576
    %v1578 = vsel %vm267, %v1577, 0
    %1580 = vmatprep.subr.mxu0 0.0
    %1581 = vmatpush1.msra.mxu0 %v107
    %1582 = vmatprep.subr.mxu0 0.0
    %1583 = vmatpush1.msra.mxu0 %v108
    %1584 = vmatprep.subr.mxu0 0.0
    %1585 = vmatpush1.msra.mxu0 %v109
    %1586 = vmatprep.subr.mxu0 0.0
    %1587 = vmatpush1.msra.mxu0 %v110
    %1588 = vmatprep.subr.mxu0 0.0
    %1589 = vmatpush1.msra.mxu0 0.0
    %1590 = vmatprep.subr.mxu0 0.0
    %1591 = vmatpush1.msra.mxu0 0.0
    %1592 = vmatprep.subr.mxu0 0.0
    %1593 = vmatpush1.msra.mxu0 0.0
    %1594 = vmatprep.subr.mxu0 0.0
    %1595 = vmatpush1.msra.mxu0 0.0
    %1596 = vmatprep.subr.mxu0 0.0
    %1597 = vmatpush1.msra.mxu0 0.0
    %1598 = vmatprep.subr.mxu0 0.0
    %1599 = vmatpush1.msra.mxu0 0.0
    %1600 = vmatprep.subr.mxu0 0.0
    %1601 = vmatpush1.msra.mxu0 0.0
    %1602 = vmatprep.subr.mxu0 0.0
    %1603 = vmatpush1.msra.mxu0 0.0
    %1604 = vmatprep.subr.mxu0 0.0
    %1605 = vmatpush1.msra.mxu0 0.0
    %1606 = vmatprep.subr.mxu0 0.0
    %1607 = vmatpush1.msra.mxu0 0.0
    %1608 = vmatprep.subr.mxu0 0.0
    %1609 = vmatpush1.msra.mxu0 0.0
    %1610 = vmatprep.subr.mxu0 0.0
    %1611 = vmatpush1.msra.mxu0 0.0
    %1612 = vmatprep.subr.mxu0 0.0
    %1613 = vmatpush1.msra.mxu0 0.0
    %1614 = vmatprep.subr.mxu0 0.0
    %1615 = vmatpush1.msra.mxu0 0.0
    %1616 = vmatprep.subr.mxu0 0.0
    %1617 = vmatpush1.msra.mxu0 0.0
    %1618 = vmatprep.subr.mxu0 0.0
    %1619 = vmatpush1.msra.mxu0 0.0
    %1620 = vmatprep.subr.mxu0 0.0
    %1621 = vmatpush1.msra.mxu0 0.0
    %1622 = vmatprep.subr.mxu0 0.0
    %1623 = vmatpush1.msra.mxu0 0.0
    %1624 = vmatprep.subr.mxu0 0.0
    %1625 = vmatpush1.msra.mxu0 0.0
    %1626 = vmatprep.subr.mxu0 0.0
    %1627 = vmatpush1.msra.mxu0 0.0
    %1628 = vmatprep.subr.mxu0 0.0
    %1629 = vmatpush1.msra.mxu0 0.0
    %1630 = vmatprep.subr.mxu0 0.0
    %1631 = vmatpush1.msra.mxu0 0.0
    %1632 = vmatprep.subr.mxu0 0.0
    %1633 = vmatpush1.msra.mxu0 0.0
    %1634 = vmatprep.subr.mxu0 0.0
    %1635 = vmatpush1.msra.mxu0 0.0
    %1636 = vmatprep.subr.mxu0 0.0
    %1637 = vmatpush1.msra.mxu0 0.0
    %1638 = vmatprep.subr.mxu0 0.0
    %1639 = vmatpush1.msra.mxu0 0.0
    %1640 = vmatprep.subr.mxu0 0.0
    %1641 = vmatpush1.msra.mxu0 0.0
    %1642 = vmatprep.subr.mxu0 0.0
    %1643 = vmatpush1.msra.mxu0 0.0
    %1644 = vmatprep.mubr.f32.mxu0 0.0
    %1645 = vmatmul.mubr.f32.gmra.mrb[0].mxu0 %v1578
    %v1646 = vpop.f32.mrb[0].mxu0
    %v1647 = vadd.f32 0.0, %v1646
    %v1648 = vpop.f32.mrb[0].mxu0
    %1649 = vdwg.mxu0
    %v1650 = vadd.f32 %v1574, %v1647
    %v1651 = vxor.u32 %v1650, 2147483648
    %v1652 = vmul.f32 %v1651, 1.442695
    %v1653 = vpow.pop %v1652
    %v1654 = vadd.f32 %v1653, 1.0
    %v1655 = vrcp.pop %v1654
    %v1656 = vmul.f32 1.0, %v1655
    %v1657 = vtanh.pop %v1650
    %v1658 = vmul.f32 %v1656, %v1567
    %1660 = vrot.lane.b32.xlu0 %v1657, 64
    %v1661 = vpop.permute.xlu0 %1660
    %v1663 = vmul.f32 %v1656, %v1661
    %1665 = vrot.lane.b32.xlu0 %v1663, 32
    %v1666 = vpop.permute.xlu0 %1665
    %v1668 = vadd.f32 %v1658, %v1666
    %v1669 = vtanh.pop %v1668
    %1671 = vrot.lane.b32.xlu0 %v1669, 64
    %v1672 = vpop.permute.xlu0 %1671
    %v1674 = vmul.f32 %v1656, %v1672
    %v1675 = vld [vmem:[%s690] sm:$0xff]
    %1677 = vrot.lane.b32.xlu0 %v1674, 32
    %v1678 = vpop.permute.xlu0 %1677
    %v1679 = vsel %vm267, %v1678, 0
    %1681 = vmatprep.subr.mxu0 0.0
    %1682 = vmatpush1.msra.mxu0 %v107
    %1683 = vmatprep.subr.mxu0 0.0
    %1684 = vmatpush1.msra.mxu0 %v108
    %1685 = vmatprep.subr.mxu0 0.0
    %1686 = vmatpush1.msra.mxu0 %v109
    %1687 = vmatprep.subr.mxu0 0.0
    %1688 = vmatpush1.msra.mxu0 %v110
    %1689 = vmatprep.subr.mxu0 0.0
    %1690 = vmatpush1.msra.mxu0 0.0
    %1691 = vmatprep.subr.mxu0 0.0
    %1692 = vmatpush1.msra.mxu0 0.0
    %1693 = vmatprep.subr.mxu0 0.0
    %1694 = vmatpush1.msra.mxu0 0.0
    %1695 = vmatprep.subr.mxu0 0.0
    %1696 = vmatpush1.msra.mxu0 0.0
    %1697 = vmatprep.subr.mxu0 0.0
    %1698 = vmatpush1.msra.mxu0 0.0
    %1699 = vmatprep.subr.mxu0 0.0
    %1700 = vmatpush1.msra.mxu0 0.0
    %1701 = vmatprep.subr.mxu0 0.0
    %1702 = vmatpush1.msra.mxu0 0.0
    %1703 = vmatprep.subr.mxu0 0.0
    %1704 = vmatpush1.msra.mxu0 0.0
    %1705 = vmatprep.subr.mxu0 0.0
    %1706 = vmatpush1.msra.mxu0 0.0
    %1707 = vmatprep.subr.mxu0 0.0
    %1708 = vmatpush1.msra.mxu0 0.0
    %1709 = vmatprep.subr.mxu0 0.0
    %1710 = vmatpush1.msra.mxu0 0.0
    %1711 = vmatprep.subr.mxu0 0.0
    %1712 = vmatpush1.msra.mxu0 0.0
    %1713 = vmatprep.subr.mxu0 0.0
    %1714 = vmatpush1.msra.mxu0 0.0
    %1715 = vmatprep.subr.mxu0 0.0
    %1716 = vmatpush1.msra.mxu0 0.0
    %1717 = vmatprep.subr.mxu0 0.0
    %1718 = vmatpush1.msra.mxu0 0.0
    %1719 = vmatprep.subr.mxu0 0.0
    %1720 = vmatpush1.msra.mxu0 0.0
    %1721 = vmatprep.subr.mxu0 0.0
    %1722 = vmatpush1.msra.mxu0 0.0
    %1723 = vmatprep.subr.mxu0 0.0
    %1724 = vmatpush1.msra.mxu0 0.0
    %1725 = vmatprep.subr.mxu0 0.0
    %1726 = vmatpush1.msra.mxu0 0.0
    %1727 = vmatprep.subr.mxu0 0.0
    %1728 = vmatpush1.msra.mxu0 0.0
    %1729 = vmatprep.subr.mxu0 0.0
    %1730 = vmatpush1.msra.mxu0 0.0
    %1731 = vmatprep.subr.mxu0 0.0
    %1732 = vmatpush1.msra.mxu0 0.0
    %1733 = vmatprep.subr.mxu0 0.0
    %1734 = vmatpush1.msra.mxu0 0.0
    %1735 = vmatprep.subr.mxu0 0.0
    %1736 = vmatpush1.msra.mxu0 0.0
    %1737 = vmatprep.subr.mxu0 0.0
    %1738 = vmatpush1.msra.mxu0 0.0
    %1739 = vmatprep.subr.mxu0 0.0
    %1740 = vmatpush1.msra.mxu0 0.0
    %1741 = vmatprep.subr.mxu0 0.0
    %1742 = vmatpush1.msra.mxu0 0.0
    %1743 = vmatprep.subr.mxu0 0.0
    %1744 = vmatpush1.msra.mxu0 0.0
    %1745 = vmatprep.mubr.f32.mxu0 0.0
    %1746 = vmatmul.mubr.f32.gmra.mrb[0].mxu0 %v1679
    %v1747 = vpop.f32.mrb[0].mxu0
    %v1748 = vadd.f32 0.0, %v1747
    %v1749 = vpop.f32.mrb[0].mxu0
    %1750 = vdwg.mxu0
    %v1751 = vadd.f32 %v1675, %v1748
    %v1752 = vxor.u32 %v1751, 2147483648
    %v1753 = vmul.f32 %v1752, 1.442695
    %v1754 = vpow.pop %v1753
    %v1755 = vadd.f32 %v1754, 1.0
    %v1756 = vrcp.pop %v1755
    %v1757 = vmul.f32 1.0, %v1756
    %v1758 = vtanh.pop %v1751
    %v1759 = vmul.f32 %v1757, %v1668
    %1761 = vrot.lane.b32.xlu0 %v1758, 64
    %v1762 = vpop.permute.xlu0 %1761
    %v1764 = vmul.f32 %v1757, %v1762
    %1766 = vrot.lane.b32.xlu0 %v1764, 32
    %v1767 = vpop.permute.xlu0 %1766
    %v1769 = vadd.f32 %v1759, %v1767
    %v1770 = vtanh.pop %v1769
    %1772 = vrot.lane.b32.xlu0 %v1770, 64
    %v1773 = vpop.permute.xlu0 %1772
    %v1775 = vmul.f32 %v1757, %v1773
    %v1776 = vld [vmem:[%s795] sm:$0xff]
    %1778 = vrot.lane.b32.xlu0 %v1775, 32
    %v1779 = vpop.permute.xlu0 %1778
    %v1780 = vsel %vm267, %v1779, 0
    %1782 = vmatprep.subr.mxu0 0.0
    %1783 = vmatpush1.msra.mxu0 %v107
    %1784 = vmatprep.subr.mxu0 0.0
    %1785 = vmatpush1.msra.mxu0 %v108
    %1786 = vmatprep.subr.mxu0 0.0
    %1787 = vmatpush1.msra.mxu0 %v109
    %1788 = vmatprep.subr.mxu0 0.0
    %1789 = vmatpush1.msra.mxu0 %v110
    %1790 = vmatprep.subr.mxu0 0.0
    %1791 = vmatpush1.msra.mxu0 0.0
    %1792 = vmatprep.subr.mxu0 0.0
    %1793 = vmatpush1.msra.mxu0 0.0
    %1794 = vmatprep.subr.mxu0 0.0
    %1795 = vmatpush1.msra.mxu0 0.0
    %1796 = vmatprep.subr.mxu0 0.0
    %1797 = vmatpush1.msra.mxu0 0.0
    %1798 = vmatprep.subr.mxu0 0.0
    %1799 = vmatpush1.msra.mxu0 0.0
    %1800 = vmatprep.subr.mxu0 0.0
    %1801 = vmatpush1.msra.mxu0 0.0
    %1802 = vmatprep.subr.mxu0 0.0
    %1803 = vmatpush1.msra.mxu0 0.0
    %1804 = vmatprep.subr.mxu0 0.0
    %1805 = vmatpush1.msra.mxu0 0.0
    %1806 = vmatprep.subr.mxu0 0.0
    %1807 = vmatpush1.msra.mxu0 0.0
    %1808 = vmatprep.subr.mxu0 0.0
    %1809 = vmatpush1.msra.mxu0 0.0
    %1810 = vmatprep.subr.mxu0 0.0
    %1811 = vmatpush1.msra.mxu0 0.0
    %1812 = vmatprep.subr.mxu0 0.0
    %1813 = vmatpush1.msra.mxu0 0.0
    %1814 = vmatprep.subr.mxu0 0.0
    %1815 = vmatpush1.msra.mxu0 0.0
    %1816 = vmatprep.subr.mxu0 0.0
    %1817 = vmatpush1.msra.mxu0 0.0
    %1818 = vmatprep.subr.mxu0 0.0
    %1819 = vmatpush1.msra.mxu0 0.0
    %1820 = vmatprep.subr.mxu0 0.0
    %1821 = vmatpush1.msra.mxu0 0.0
    %1822 = vmatprep.subr.mxu0 0.0
    %1823 = vmatpush1.msra.mxu0 0.0
    %1824 = vmatprep.subr.mxu0 0.0
    %1825 = vmatpush1.msra.mxu0 0.0
    %1826 = vmatprep.subr.mxu0 0.0
    %1827 = vmatpush1.msra.mxu0 0.0
    %1828 = vmatprep.subr.mxu0 0.0
    %1829 = vmatpush1.msra.mxu0 0.0
    %1830 = vmatprep.subr.mxu0 0.0
    %1831 = vmatpush1.msra.mxu0 0.0
    %1832 = vmatprep.subr.mxu0 0.0
    %1833 = vmatpush1.msra.mxu0 0.0
    %1834 = vmatprep.subr.mxu0 0.0
    %1835 = vmatpush1.msra.mxu0 0.0
    %1836 = vmatprep.subr.mxu0 0.0
    %1837 = vmatpush1.msra.mxu0 0.0
    %1838 = vmatprep.subr.mxu0 0.0
    %1839 = vmatpush1.msra.mxu0 0.0
    %1840 = vmatprep.subr.mxu0 0.0
    %1841 = vmatpush1.msra.mxu0 0.0
    %1842 = vmatprep.subr.mxu0 0.0
    %1843 = vmatpush1.msra.mxu0 0.0
    %1844 = vmatprep.subr.mxu0 0.0
    %1845 = vmatpush1.msra.mxu0 0.0
    %1846 = vmatprep.mubr.f32.mxu0 0.0
    %1847 = vmatmul.mubr.f32.gmra.mrb[0].mxu0 %v1780
    %v1848 = vpop.f32.mrb[0].mxu0
    %v1849 = vadd.f32 0.0, %v1848
    %v1850 = vpop.f32.mrb[0].mxu0
    %1851 = vdwg.mxu0
    %v1852 = vadd.f32 %v1776, %v1849
    %v1853 = vxor.u32 %v1852, 2147483648
    %v1854 = vmul.f32 %v1853, 1.442695
    %v1855 = vpow.pop %v1854
    %v1856 = vadd.f32 %v1855, 1.0
    %v1857 = vrcp.pop %v1856
    %v1858 = vmul.f32 1.0, %v1857
    %v1859 = vtanh.pop %v1852
    %v1860 = vmul.f32 %v1858, %v1769
    %1862 = vrot.lane.b32.xlu0 %v1859, 64
    %v1863 = vpop.permute.xlu0 %1862
    %v1865 = vmul.f32 %v1858, %v1863
    %1867 = vrot.lane.b32.xlu0 %v1865, 32
    %v1868 = vpop.permute.xlu0 %1867
    %v1870 = vadd.f32 %v1860, %v1868
    %v1871 = vtanh.pop %v1870
    %1873 = vrot.lane.b32.xlu0 %v1871, 64
    %v1874 = vpop.permute.xlu0 %1873
    %v1876 = vmul.f32 %v1858, %v1874
    %v1877 = vld [vmem:[%s900] sm:$0xff]
    %1879 = vrot.lane.b32.xlu0 %v1876, 32
    %v1880 = vpop.permute.xlu0 %1879
    %v1881 = vsel %vm267, %v1880, 0
    %1883 = vmatprep.subr.mxu0 0.0
    %1884 = vmatpush1.msra.mxu0 %v107
    %1885 = vmatprep.subr.mxu0 0.0
    %1886 = vmatpush1.msra.mxu0 %v108
    %1887 = vmatprep.subr.mxu0 0.0
    %1888 = vmatpush1.msra.mxu0 %v109
    %1889 = vmatprep.subr.mxu0 0.0
    %1890 = vmatpush1.msra.mxu0 %v110
    %1891 = vmatprep.subr.mxu0 0.0
    %1892 = vmatpush1.msra.mxu0 0.0
    %1893 = vmatprep.subr.mxu0 0.0
    %1894 = vmatpush1.msra.mxu0 0.0
    %1895 = vmatprep.subr.mxu0 0.0
    %1896 = vmatpush1.msra.mxu0 0.0
    %1897 = vmatprep.subr.mxu0 0.0
    %1898 = vmatpush1.msra.mxu0 0.0
    %1899 = vmatprep.subr.mxu0 0.0
    %1900 = vmatpush1.msra.mxu0 0.0
    %1901 = vmatprep.subr.mxu0 0.0
    %1902 = vmatpush1.msra.mxu0 0.0
    %1903 = vmatprep.subr.mxu0 0.0
    %1904 = vmatpush1.msra.mxu0 0.0
    %1905 = vmatprep.subr.mxu0 0.0
    %1906 = vmatpush1.msra.mxu0 0.0
    %1907 = vmatprep.subr.mxu0 0.0
    %1908 = vmatpush1.msra.mxu0 0.0
    %1909 = vmatprep.subr.mxu0 0.0
    %1910 = vmatpush1.msra.mxu0 0.0
    %1911 = vmatprep.subr.mxu0 0.0
    %1912 = vmatpush1.msra.mxu0 0.0
    %1913 = vmatprep.subr.mxu0 0.0
    %1914 = vmatpush1.msra.mxu0 0.0
    %1915 = vmatprep.subr.mxu0 0.0
    %1916 = vmatpush1.msra.mxu0 0.0
    %1917 = vmatprep.subr.mxu0 0.0
    %1918 = vmatpush1.msra.mxu0 0.0
    %1919 = vmatprep.subr.mxu0 0.0
    %1920 = vmatpush1.msra.mxu0 0.0
    %1921 = vmatprep.subr.mxu0 0.0
    %1922 = vmatpush1.msra.mxu0 0.0
    %1923 = vmatprep.subr.mxu0 0.0
    %1924 = vmatpush1.msra.mxu0 0.0
    %1925 = vmatprep.subr.mxu0 0.0
    %1926 = vmatpush1.msra.mxu0 0.0
    %1927 = vmatprep.subr.mxu0 0.0
    %1928 = vmatpush1.msra.mxu0 0.0
    %1929 = vmatprep.subr.mxu0 0.0
    %1930 = vmatpush1.msra.mxu0 0.0
    %1931 = vmatprep.subr.mxu0 0.0
    %1932 = vmatpush1.msra.mxu0 0.0
    %1933 = vmatprep.subr.mxu0 0.0
    %1934 = vmatpush1.msra.mxu0 0.0
    %1935 = vmatprep.subr.mxu0 0.0
    %1936 = vmatpush1.msra.mxu0 0.0
    %1937 = vmatprep.subr.mxu0 0.0
    %1938 = vmatpush1.msra.mxu0 0.0
    %1939 = vmatprep.subr.mxu0 0.0
    %1940 = vmatpush1.msra.mxu0 0.0
    %1941 = vmatprep.subr.mxu0 0.0
    %1942 = vmatpush1.msra.mxu0 0.0
    %1943 = vmatprep.subr.mxu0 0.0
    %1944 = vmatpush1.msra.mxu0 0.0
    %1945 = vmatprep.subr.mxu0 0.0
    %1946 = vmatpush1.msra.mxu0 0.0
    %1947 = vmatprep.mubr.f32.mxu0 0.0
    %1948 = vmatmul.mubr.f32.gmra.mrb[0].mxu0 %v1881
    %v1949 = vpop.f32.mrb[0].mxu0
    %v1950 = vadd.f32 0.0, %v1949
    %v1951 = vpop.f32.mrb[0].mxu0
    %1952 = vdwg.mxu0
    %v1953 = vadd.f32 %v1877, %v1950
    %v1954 = vxor.u32 %v1953, 2147483648
    %v1955 = vmul.f32 %v1954, 1.442695
    %v1956 = vpow.pop %v1955
    %v1957 = vadd.f32 %v1956, 1.0
    %v1958 = vrcp.pop %v1957
    %v1959 = vmul.f32 1.0, %v1958
    %v1960 = vtanh.pop %v1953
    %v1961 = vmul.f32 %v1959, %v1870
    %1963 = vrot.lane.b32.xlu0 %v1960, 64
    %v1964 = vpop.permute.xlu0 %1963
    %v1966 = vmul.f32 %v1959, %v1964
    %1968 = vrot.lane.b32.xlu0 %v1966, 32
    %v1969 = vpop.permute.xlu0 %1968
    %v1971 = vadd.f32 %v1961, %v1969
    %v1972 = vtanh.pop %v1971
    %1974 = vrot.lane.b32.xlu0 %v1972, 64
    %v1975 = vpop.permute.xlu0 %1974
    %v1977 = vmul.f32 %v1959, %v1975
    %v1978 = vld [vmem:[%s1005] sm:$0xff]
    %1980 = vrot.lane.b32.xlu0 %v1977, 32
    %v1981 = vpop.permute.xlu0 %1980
    %v1982 = vsel %vm267, %v1981, 0
    %1984 = vmatprep.subr.mxu0 0.0
    %1985 = vmatpush1.msra.mxu0 %v107
    %1986 = vmatprep.subr.mxu0 0.0
    %1987 = vmatpush1.msra.mxu0 %v108
    %1988 = vmatprep.subr.mxu0 0.0
    %1989 = vmatpush1.msra.mxu0 %v109
    %1990 = vmatprep.subr.mxu0 0.0
    %1991 = vmatpush1.msra.mxu0 %v110
    %1992 = vmatprep.subr.mxu0 0.0
    %1993 = vmatpush1.msra.mxu0 0.0
    %1994 = vmatprep.subr.mxu0 0.0
    %1995 = vmatpush1.msra.mxu0 0.0
    %1996 = vmatprep.subr.mxu0 0.0
    %1997 = vmatpush1.msra.mxu0 0.0
    %1998 = vmatprep.subr.mxu0 0.0
    %1999 = vmatpush1.msra.mxu0 0.0
    %2000 = vmatprep.subr.mxu0 0.0
    %2001 = vmatpush1.msra.mxu0 0.0
    %2002 = vmatprep.subr.mxu0 0.0
    %2003 = vmatpush1.msra.mxu0 0.0
    %2004 = vmatprep.subr.mxu0 0.0
    %2005 = vmatpush1.msra.mxu0 0.0
    %2006 = vmatprep.subr.mxu0 0.0
    %2007 = vmatpush1.msra.mxu0 0.0
    %2008 = vmatprep.subr.mxu0 0.0
    %2009 = vmatpush1.msra.mxu0 0.0
    %2010 = vmatprep.subr.mxu0 0.0
    %2011 = vmatpush1.msra.mxu0 0.0
    %2012 = vmatprep.subr.mxu0 0.0
    %2013 = vmatpush1.msra.mxu0 0.0
    %2014 = vmatprep.subr.mxu0 0.0
    %2015 = vmatpush1.msra.mxu0 0.0
    %2016 = vmatprep.subr.mxu0 0.0
    %2017 = vmatpush1.msra.mxu0 0.0
    %2018 = vmatprep.subr.mxu0 0.0
    %2019 = vmatpush1.msra.mxu0 0.0
    %2020 = vmatprep.subr.mxu0 0.0
    %2021 = vmatpush1.msra.mxu0 0.0
    %2022 = vmatprep.subr.mxu0 0.0
    %2023 = vmatpush1.msra.mxu0 0.0
    %2024 = vmatprep.subr.mxu0 0.0
    %2025 = vmatpush1.msra.mxu0 0.0
    %2026 = vmatprep.subr.mxu0 0.0
    %2027 = vmatpush1.msra.mxu0 0.0
    %2028 = vmatprep.subr.mxu0 0.0
    %2029 = vmatpush1.msra.mxu0 0.0
    %2030 = vmatprep.subr.mxu0 0.0
    %2031 = vmatpush1.msra.mxu0 0.0
    %2032 = vmatprep.subr.mxu0 0.0
    %2033 = vmatpush1.msra.mxu0 0.0
    %2034 = vmatprep.subr.mxu0 0.0
    %2035 = vmatpush1.msra.mxu0 0.0
    %2036 = vmatprep.subr.mxu0 0.0
    %2037 = vmatpush1.msra.mxu0 0.0
    %2038 = vmatprep.subr.mxu0 0.0
    %2039 = vmatpush1.msra.mxu0 0.0
    %2040 = vmatprep.subr.mxu0 0.0
    %2041 = vmatpush1.msra.mxu0 0.0
    %2042 = vmatprep.subr.mxu0 0.0
    %2043 = vmatpush1.msra.mxu0 0.0
    %2044 = vmatprep.subr.mxu0 0.0
    %2045 = vmatpush1.msra.mxu0 0.0
    %2046 = vmatprep.subr.mxu0 0.0
    %2047 = vmatpush1.msra.mxu0 0.0
    %2048 = vmatprep.mubr.f32.mxu0 0.0
    %2049 = vmatmul.mubr.f32.gmra.mrb[0].mxu0 %v1982
    %v2050 = vpop.f32.mrb[0].mxu0
    %v2051 = vadd.f32 0.0, %v2050
    %v2052 = vpop.f32.mrb[0].mxu0
    %2053 = vdwg.mxu0
    %v2054 = vadd.f32 %v1978, %v2051
    %v2055 = vxor.u32 %v2054, 2147483648
    %v2056 = vmul.f32 %v2055, 1.442695
    %v2057 = vpow.pop %v2056
    %v2058 = vadd.f32 %v2057, 1.0
    %v2059 = vrcp.pop %v2058
    %v2060 = vmul.f32 1.0, %v2059
    %v2061 = vtanh.pop %v2054
    %v2062 = vmul.f32 %v2060, %v1971
    %2064 = vrot.lane.b32.xlu0 %v2061, 64
    %v2065 = vpop.permute.xlu0 %2064
    %v2067 = vmul.f32 %v2060, %v2065
    %2069 = vrot.lane.b32.xlu0 %v2067, 32
    %v2070 = vpop.permute.xlu0 %2069
    %v2072 = vadd.f32 %v2062, %v2070
    %v2073 = vtanh.pop %v2072
    %2075 = vrot.lane.b32.xlu0 %v2073, 64
    %v2076 = vpop.permute.xlu0 %2075
    %v2078 = vmul.f32 %v2060, %v2076
    %2080 = vrot.lane.b32.xlu0 %v2078, 32
    %v2081 = vpop.permute.xlu0 %2080
    %2083 = vst.msk [vmem:[#allocation6] sm:$0xff] %vm267, %v2081
    %2085 = vrot.lane.b32.xlu0 %v2072, 96
    %v2086 = vpop.permute.xlu0 %2085
    %2088 = vst.msk [vmem:[#allocation7] sm:$0xff] %vm267, %v2086
    // Predicated region
    $region58: #{tpu_custom_call.1} parent=1 // pred_check
      %p2089 = pneg %p87
    $region59: #{tpu_custom_call.1} parent=1 // pred_check_branch
      %2091 = sbr.rel (%p2089) target = $region61
    $region60: #{tpu_custom_call.1} parent=1 // pred_region
      %v2092 = vld [vmem:[#allocation6] sm:$0xff]
      %v2093 = vld [vmem:[%s7] sm:$0xff]
      %v2094 = vld [vmem:[%s7 + $0x8] sm:$0xff]
      %v2095 = vld [vmem:[%s7 + $0x10] sm:$0xff]
      %v2096 = vld [vmem:[%s7 + $0x18] sm:$0xff]
      %v2097 = vld [vmem:[%s8] sm:$0x1]
      %v2099 = vlaneseq
      %v2100 = vshrl.u32 %v2099, 7
      %v2101 = vsub.s32 0, %v2100
      %v2102 = vrot.slane %v2097, %v2101
      %v2105 = vsel %vm267, %v2092, 0
      %2107 = vmatprep.subr.mxu0 0.0
      %2108 = vmatpush1.msra.mxu0 %v2093
      %2109 = vmatprep.subr.mxu0 0.0
      %2110 = vmatpush1.msra.mxu0 %v2094
      %2111 = vmatprep.subr.mxu0 0.0
      %2112 = vmatpush1.msra.mxu0 %v2095
      %2113 = vmatprep.subr.mxu0 0.0
      %2114 = vmatpush1.msra.mxu0 %v2096
      %2115 = vmatprep.subr.mxu0 0.0
      %2116 = vmatpush1.msra.mxu0 0.0
      %2117 = vmatprep.subr.mxu0 0.0
      %2118 = vmatpush1.msra.mxu0 0.0
      %2119 = vmatprep.subr.mxu0 0.0
      %2120 = vmatpush1.msra.mxu0 0.0
      %2121 = vmatprep.subr.mxu0 0.0
      %2122 = vmatpush1.msra.mxu0 0.0
      %2123 = vmatprep.subr.mxu0 0.0
      %2124 = vmatpush1.msra.mxu0 0.0
      %2125 = vmatprep.subr.mxu0 0.0
      %2126 = vmatpush1.msra.mxu0 0.0
      %2127 = vmatprep.subr.mxu0 0.0
      %2128 = vmatpush1.msra.mxu0 0.0
      %2129 = vmatprep.subr.mxu0 0.0
      %2130 = vmatpush1.msra.mxu0 0.0
      %2131 = vmatprep.subr.mxu0 0.0
      %2132 = vmatpush1.msra.mxu0 0.0
      %2133 = vmatprep.subr.mxu0 0.0
      %2134 = vmatpush1.msra.mxu0 0.0
      %2135 = vmatprep.subr.mxu0 0.0
      %2136 = vmatpush1.msra.mxu0 0.0
      %2137 = vmatprep.subr.mxu0 0.0
      %2138 = vmatpush1.msra.mxu0 0.0
      %2139 = vmatprep.subr.mxu0 0.0
      %2140 = vmatpush1.msra.mxu0 0.0
      %2141 = vmatprep.subr.mxu0 0.0
      %2142 = vmatpush1.msra.mxu0 0.0
      %2143 = vmatprep.subr.mxu0 0.0
      %2144 = vmatpush1.msra.mxu0 0.0
      %2145 = vmatprep.subr.mxu0 0.0
      %2146 = vmatpush1.msra.mxu0 0.0
      %2147 = vmatprep.subr.mxu0 0.0
      %2148 = vmatpush1.msra.mxu0 0.0
      %2149 = vmatprep.subr.mxu0 0.0
      %2150 = vmatpush1.msra.mxu0 0.0
      %2151 = vmatprep.subr.mxu0 0.0
      %2152 = vmatpush1.msra.mxu0 0.0
      %2153 = vmatprep.subr.mxu0 0.0
      %2154 = vmatpush1.msra.mxu0 0.0
      %2155 = vmatprep.subr.mxu0 0.0
      %2156 = vmatpush1.msra.mxu0 0.0
      %2157 = vmatprep.subr.mxu0 0.0
      %2158 = vmatpush1.msra.mxu0 0.0
      %2159 = vmatprep.subr.mxu0 0.0
      %2160 = vmatpush1.msra.mxu0 0.0
      %2161 = vmatprep.subr.mxu0 0.0
      %2162 = vmatpush1.msra.mxu0 0.0
      %2163 = vmatprep.subr.mxu0 0.0
      %2164 = vmatpush1.msra.mxu0 0.0
      %2165 = vmatprep.subr.mxu0 0.0
      %2166 = vmatpush1.msra.mxu0 0.0
      %2167 = vmatprep.subr.mxu0 0.0
      %2168 = vmatpush1.msra.mxu0 0.0
      %2169 = vmatprep.subr.mxu0 0.0
      %2170 = vmatpush1.msra.mxu0 0.0
      %2171 = vmatprep.mubr.f32.mxu0 0.0
      %2172 = vmatmul.mubr.f32.gmra.mrb[0].mxu0 %v2105
      %v2173 = vpop.f32.mrb[0].mxu0
      %v2174 = vadd.f32 %v2102, %v2173
      %v2175 = vpop.f32.mrb[0].mxu0
      %2176 = vdwg.mxu0
      %vm2177 = vcmask 31744
      %2178 = vst.msk [vmem:[%s9] sm:$0xff] %vm2177, %v2174
    $region61: #{tpu_custom_call.1} parent=1 // pred_fallthru
      _
    // Predicated region
    $region62: #{tpu_custom_call.1} parent=1 // pred_check
      _
    $region63: #{tpu_custom_call.1} parent=1 // pred_check_branch
      %2180 = sbr.rel (0) target = $region65
    $region64: #{tpu_custom_call.1} parent=1 // pred_region
      _
    $region65: #{tpu_custom_call.1} parent=1 // pred_fallthru
      _
    // Predicated region
    $region66: #{tpu_custom_call.1} parent=1 // pred_check
      _
    $region67: #{tpu_custom_call.1} parent=1 // pred_check_branch
      %2182 = sbr.rel (0) target = $region69
    $region68: #{tpu_custom_call.1} parent=1 // pred_region
      _
    $region69: #{tpu_custom_call.1} parent=1 // pred_fallthru
      _
    %2183 = vsyncpa [#allocation9], 1
    %2184 = vsyncpa [#allocation11], 1
    %2185 = vsyncpa [#allocation14], 1

</llo_original>
